<compile_context>
chip_gen: v7x
topology: tpu7x:2x2x1
jax: 0.10.0
libtpu: 0.0.40
codegen_flags: <defaults>
</compile_context>

<pallas_src>
import functools
import math

import jax
import jax.numpy as jnp
from jax.experimental import pallas as pl
from jax.experimental.pallas import tpu as pltpu


def _round_up(x, m):
    return ((x + m - 1) // m) * m


def _modified_ffn_kernel(coords_ref, proj_w_ref, proj_b_ref,
                         t12_w_ref, t12_b_ref,
                         w1_ref, b1_ref, w2_ref, b2_ref, w3_ref, b3_ref,
                         wout_ref, bout_ref,
                         out_ref):
    """Whole forward for one (features, tile_n) column tile, entirely in VMEM."""
    hidden = w1_ref.shape[0]
    x = coords_ref[...].astype(jnp.float32)                    # (in, tn)

    # Fused Fourier + layer-0 projection.  K = in_features (tiny), so a few
    # VPU broadcast-FMAs over the stacked (2H, in) weight; the stacked layout
    # shares the per-k coordinate-row broadcast between both projections and
    # runs a single sin pass over (2H, tn).
    # TODO(synk): offloading this K=3 dot to the (idle) MXU is a possible
    # further micro-opt; needs a bundle dump to confirm it beats the VPU FMAs.
    pw = proj_w_ref[...]                                        # (2H, in)
    pre = proj_b_ref[...]                                       # (2H, 1) -> bcast
    for k in range(x.shape[0]):
        pre = pre + pw[:, k:k + 1] * x[k:k + 1, :]
    act = jnp.sin(pre)                                          # (2H, tn)
    ff = act[:hidden, :]                                        # [sin(Bx); cos(Bx)]
    h = act[hidden:, :]                                         # layer-0 output

    # Gate branches from one stacked MXU matmul:
    #   rows [:H]  -> t1 = T1 ff + b1
    #   rows [H:]  -> d  = t2 - t1  (weights pre-differenced in the wrapper)
    t12 = jnp.dot(t12_w_ref[...], ff,
                  preferred_element_type=jnp.float32) + t12_b_ref[...]
    t1 = t12[:hidden, :]
    d = t12[hidden:, :]

    # Three transform-gated layers: o = sin(W h + b); h = t1 + o * d.
    for w_ref, b_ref in ((w1_ref, b1_ref), (w2_ref, b2_ref), (w3_ref, b3_ref)):
        o = jnp.sin(jnp.dot(w_ref[...], h,
                            preferred_element_type=jnp.float32) + b_ref[...])
        h = t1 + o * d

    # Final linear (no nonlinearity).  Output rows are lane-dense.
    out = jnp.dot(wout_ref[...], h,
                  preferred_element_type=jnp.float32) + bout_ref[...]
    out_ref[...] = out.astype(out_ref.dtype)


def _resident(shape):
    # Small parameter tensors: one whole-array block, same block index at every
    # grid step -> stays resident in VMEM across the row loop.
    return pl.BlockSpec(shape, lambda i: tuple(0 for _ in shape))


@functools.partial(jax.jit, static_argnames=("tile_n",))
def ffn_forward(coords, params, tile_n=8192):
    """coords: (..., in_features) float32. Returns dict like the torch module."""
    in_features = coords.shape[-1]
    lead_shape = coords.shape[:-1]
    out_features = params["w_out"].shape[0]
    hidden = params["w0"].shape[0]
    half = params["fourier"].shape[1]

    # Flatten leading dims; transpose so rows land on the lane axis.
    x2 = coords.reshape(-1, in_features).astype(jnp.float32)
    n = x2.shape[0]

    # Row-tile sizing: large tiles amortize the ~0.35us/grid-step overhead; the
    # step count is made even (>=4 when there is enough work) so the "parallel"
    # axis splits evenly across the two TensorCores on megacore parts (v7x).
    n_rounded = _round_up(max(n, 1), 128)
    tn = max(128, min(_round_up(tile_n, 128), n_rounded))
    steps = pl.cdiv(n_rounded, tn)
    if n_rounded >= 8 * 1024:
        steps = max(4, steps + (steps % 2))
    elif n_rounded >= 2 * 128:
        steps = max(2, steps + (steps % 2))
    tn = max(128, _round_up(pl.cdiv(n_rounded, steps), 128))
    n_total = _round_up(n_rounded, tn)

    # Pad + transpose (no zeros+scatter).
    # TODO(synk): for very large point clouds, accept natural-layout coords and
    # do the 3-wide transpose in-kernel (XLU is idle) to save one HBM pass.
    xt = jnp.pad(x2.T, ((0, 0), (0, n_total - n)))              # (in, n_total)

    # --- Stack/fuse parameters (tiny, one-time, inside jit) ------------------
    # Fourier features folded with layer 0: cos(t) = sin(t + pi/2), so
    #   rows [:H]  = [B^T ; B^T] with phase [0 ; pi/2]   -> ff
    #   rows [H:]  = W0 with bias b0                      -> layer-0 h
    b_t = params["fourier"].T.astype(jnp.float32)               # (half, in)
    proj_w = jnp.concatenate(
        [b_t, b_t, params["w0"].astype(jnp.float32)], axis=0)   # (2H, in)
    proj_b = jnp.concatenate(
        [jnp.zeros((half, 1), jnp.float32),
         jnp.full((half, 1), jnp.pi / 2, jnp.float32),
         params["b0"].astype(jnp.float32)], axis=0)             # (2H, 1)

    # Gate branches fused into one matmul: rows [:H] -> t1, rows [H:] -> t2-t1.
    t1_w = params["t1_w"].astype(jnp.float32)
    t2_w = params["t2_w"].astype(jnp.float32)
    t1_b = params["t1_b"].astype(jnp.float32)
    t2_b = params["t2_b"].astype(jnp.float32)
    t12_w = jnp.concatenate([t1_w, t2_w - t1_w], axis=0)        # (2H, H)
    t12_b = jnp.concatenate([t1_b, t2_b - t1_b], axis=0)        # (2H, 1)

    args = (xt, proj_w, proj_b, t12_w, t12_b,
            params["w1"], params["b1"], params["w2"], params["b2"],
            params["w3"], params["b3"],
            params["w_out"], params["b_out"])

    out_t = pl.pallas_call(
        _modified_ffn_kernel,
        out_shape=jax.ShapeDtypeStruct((out_features, n_total), jnp.float32),
        grid_spec=pltpu.PrefetchScalarGridSpec(
            num_scalar_prefetch=0,
            grid=(n_total // tn,),
            in_specs=[pl.BlockSpec((in_features, tn), lambda i: (0, i))]
                     + [_resident(a.shape) for a in args[1:]],
            out_specs=pl.BlockSpec((out_features, tn), lambda i: (0, i)),
        ),
        compiler_params=pltpu.CompilerParams(
            dimension_semantics=("parallel",)),
    )(*args)

    out = out_t[:, :n].T.reshape(*lead_shape, out_features)
    # TODO(synk): torch's coords.clone().detach().requires_grad_(True) autograd
    # bookkeeping has no JAX analog; use jax.grad on this function for d/dcoords.
    return {"model_in": coords, "model_out": out}


def init_ffn_params(key, in_features=3, hidden_features=20, out_features=1,
                    num_hidden_layers=3, freq=math.pi, std=1.0):
    """Synthetic init mirroring the torch module's shapes.

    Weights kept in PyTorch (out, in) layout (what the transposed kernel
    needs); biases stored as (out, 1) columns.
    """
    assert num_hidden_layers == 3, "kernel unrolls the 3 transform-gated layers"
    keys = jax.random.split(key, 15)
    half = hidden_features // 2

    def xavier_normal(k, fan_out, fan_in):
        s = math.sqrt(2.0 / (fan_in + fan_out))
        return jax.random.normal(k, (fan_out, fan_in), jnp.float32) * s

    def bias_uniform(k, fan_in, fan_out):
        bound = 1.0 / math.sqrt(fan_in)
        return jax.random.uniform(k, (fan_out, 1), jnp.float32, -bound, bound)

    return {
        # fourier_features ~ N(0, std) * freq, frozen (not trainable).
        "fourier": jax.random.normal(keys[0], (in_features, half), jnp.float32) * std * freq,
        "w0": xavier_normal(keys[1], hidden_features, in_features),
        "b0": bias_uniform(keys[2], in_features, hidden_features),
        "w1": xavier_normal(keys[3], hidden_features, hidden_features),
        "b1": bias_uniform(keys[4], hidden_features, hidden_features),
        "w2": xavier_normal(keys[5], hidden_features, hidden_features),
        "b2": bias_uniform(keys[6], hidden_features, hidden_features),
        "w3": xavier_normal(keys[7], hidden_features, hidden_features),
        "b3": bias_uniform(keys[8], hidden_features, hidden_features),
        "w_out": xavier_normal(keys[9], out_features, hidden_features),
        "b_out": bias_uniform(keys[10], hidden_features, out_features),
        "t1_w": xavier_normal(keys[11], hidden_features, hidden_features),
        "t1_b": bias_uniform(keys[12], hidden_features, hidden_features),
        "t2_w": xavier_normal(keys[13], hidden_features, hidden_features),
        "t2_b": bias_uniform(keys[14], hidden_features, hidden_features),
    }


def ffn_reference(coords, params):
    """Pure-JAX reference with the exact ModifiedFFN forward semantics."""
    proj = coords @ params["fourier"]
    ff = jnp.concatenate([jnp.sin(proj), jnp.cos(proj)], axis=-1)
    t1 = ff @ params["t1_w"].T + params["t1_b"][:, 0]
    t2 = ff @ params["t2_w"].T + params["t2_b"][:, 0]
    h = jnp.sin(coords @ params["w0"].T + params["b0"][:, 0])
    for i in (1, 2, 3):
        o = jnp.sin(h @ params[f"w{i}"].T + params[f"b{i}"][:, 0])
        h = (1.0 - o) * t1 + o * t2
    return h @ params["w_out"].T + params["b_out"][:, 0]


if __name__ == "__main__":
    key = jax.random.PRNGKey(0)
    pkey, ckey = jax.random.split(key)

    in_features, hidden_features, out_features = 3, 20, 1
    params = init_ffn_params(pkey, in_features, hidden_features, out_features)

    # model_input['coords']: batch of 2, 128 points each, 3-D coordinates.
    coords = jax.random.uniform(ckey, (2, 128, in_features), jnp.float32, -1.0, 1.0)
    model_input = {"coords": coords}

    result = ffn_forward(model_input["coords"], params)
    jax.block_until_ready(result["model_out"])

    ref = ffn_reference(coords, params)
    assert result["model_out"].shape == (2, 128, out_features)
    max_err = float(jnp.max(jnp.abs(result["model_out"] - ref)))
    assert max_err < 5e-5, f"max abs error {max_err}"
    print("KERNEL_OK")
</pallas_src>

<mosaic_0001>
module attributes {stable_mosaic.version = 11 : i64} {
  func.func @_modified_ffn_kernel(%arg0: i32, %arg1: memref<3x128xf32, #tpu.memory_space<vmem>>, %arg2: memref<40x3xf32, #tpu.memory_space<vmem>>, %arg3: memref<40x1xf32, #tpu.memory_space<vmem>>, %arg4: memref<40x20xf32, #tpu.memory_space<vmem>>, %arg5: memref<40x1xf32, #tpu.memory_space<vmem>>, %arg6: memref<20x20xf32, #tpu.memory_space<vmem>>, %arg7: memref<20x1xf32, #tpu.memory_space<vmem>>, %arg8: memref<20x20xf32, #tpu.memory_space<vmem>>, %arg9: memref<20x1xf32, #tpu.memory_space<vmem>>, %arg10: memref<20x20xf32, #tpu.memory_space<vmem>>, %arg11: memref<20x1xf32, #tpu.memory_space<vmem>>, %arg12: memref<1x20xf32, #tpu.memory_space<vmem>>, %arg13: memref<1x1xf32, #tpu.memory_space<vmem>>, %arg14: memref<1x128xf32, #tpu.memory_space<vmem>>) attributes {dimension_semantics = [#tpu.dimension_semantics<parallel>], iteration_bounds = array<i64: 2>, scalar_prefetch = 0 : i64, scratch_operands = 0 : i64, tpu.core_type = #tpu.core_type<tc>, window_params = [{transform_indices = @transform_0, window_bounds = array<i64: 3, 128>}, {pipeline_mode = #tpu.pipeline_mode<synchronous>, transform_indices = @transform_1, window_bounds = array<i64: 40, 3>}, {pipeline_mode = #tpu.pipeline_mode<synchronous>, transform_indices = @transform_2, window_bounds = array<i64: 40, 1>}, {pipeline_mode = #tpu.pipeline_mode<synchronous>, transform_indices = @transform_3, window_bounds = array<i64: 40, 20>}, {pipeline_mode = #tpu.pipeline_mode<synchronous>, transform_indices = @transform_4, window_bounds = array<i64: 40, 1>}, {pipeline_mode = #tpu.pipeline_mode<synchronous>, transform_indices = @transform_5, window_bounds = array<i64: 20, 20>}, {pipeline_mode = #tpu.pipeline_mode<synchronous>, transform_indices = @transform_6, window_bounds = array<i64: 20, 1>}, {pipeline_mode = #tpu.pipeline_mode<synchronous>, transform_indices = @transform_7, window_bounds = array<i64: 20, 20>}, {pipeline_mode = #tpu.pipeline_mode<synchronous>, transform_indices = @transform_8, window_bounds = array<i64: 20, 1>}, {pipeline_mode = #tpu.pipeline_mode<synchronous>, transform_indices = @transform_9, window_bounds = array<i64: 20, 20>}, {pipeline_mode = #tpu.pipeline_mode<synchronous>, transform_indices = @transform_10, window_bounds = array<i64: 20, 1>}, {pipeline_mode = #tpu.pipeline_mode<synchronous>, transform_indices = @transform_11, window_bounds = array<i64: 1, 20>}, {pipeline_mode = #tpu.pipeline_mode<synchronous>, transform_indices = @transform_12, window_bounds = array<i64: 1, 1>}, {transform_indices = @transform_13, window_bounds = array<i64: 1, 128>}]} {
    %c0 = arith.constant 0 : index
    %c0_0 = arith.constant 0 : index
    %0 = vector.load %arg1[%c0, %c0_0] : memref<3x128xf32, #tpu.memory_space<vmem>>, vector<3x128xf32>
    %c0_1 = arith.constant 0 : index
    %c0_2 = arith.constant 0 : index
    %1 = vector.load %arg2[%c0_1, %c0_2] : memref<40x3xf32, #tpu.memory_space<vmem>>, vector<40x3xf32>
    %c0_3 = arith.constant 0 : index
    %c0_4 = arith.constant 0 : index
    %2 = vector.load %arg3[%c0_3, %c0_4] : memref<40x1xf32, #tpu.memory_space<vmem>>, vector<40x1xf32>
    %3 = vector.extract_strided_slice %1 {offsets = [0, 0], sizes = [40, 1], strides = [1, 1]} : vector<40x3xf32> to vector<40x1xf32>
    %4 = vector.extract_strided_slice %0 {offsets = [0, 0], sizes = [1, 128], strides = [1, 1]} : vector<3x128xf32> to vector<1x128xf32>
    %5 = vector.broadcast %3 : vector<40x1xf32> to vector<40x128xf32>
    %6 = vector.broadcast %4 : vector<1x128xf32> to vector<40x128xf32>
    %7 = arith.mulf %5, %6 : vector<40x128xf32>
    %8 = vector.broadcast %2 : vector<40x1xf32> to vector<40x128xf32>
    %9 = arith.addf %8, %7 : vector<40x128xf32>
    %10 = vector.extract_strided_slice %1 {offsets = [0, 1], sizes = [40, 1], strides = [1, 1]} : vector<40x3xf32> to vector<40x1xf32>
    %11 = vector.extract_strided_slice %0 {offsets = [1, 0], sizes = [1, 128], strides = [1, 1]} : vector<3x128xf32> to vector<1x128xf32>
    %12 = vector.broadcast %10 : vector<40x1xf32> to vector<40x128xf32>
    %13 = vector.broadcast %11 : vector<1x128xf32> to vector<40x128xf32>
    %14 = arith.mulf %12, %13 : vector<40x128xf32>
    %15 = arith.addf %9, %14 : vector<40x128xf32>
    %16 = vector.extract_strided_slice %1 {offsets = [0, 2], sizes = [40, 1], strides = [1, 1]} : vector<40x3xf32> to vector<40x1xf32>
    %17 = vector.extract_strided_slice %0 {offsets = [2, 0], sizes = [1, 128], strides = [1, 1]} : vector<3x128xf32> to vector<1x128xf32>
    %18 = vector.broadcast %16 : vector<40x1xf32> to vector<40x128xf32>
    %19 = vector.broadcast %17 : vector<1x128xf32> to vector<40x128xf32>
    %20 = arith.mulf %18, %19 : vector<40x128xf32>
    %21 = arith.addf %15, %20 : vector<40x128xf32>
    %22 = math.sin %21 : vector<40x128xf32>
    %23 = vector.extract_strided_slice %22 {offsets = [0, 0], sizes = [20, 128], strides = [1, 1]} : vector<40x128xf32> to vector<20x128xf32>
    %24 = vector.extract_strided_slice %22 {offsets = [20, 0], sizes = [20, 128], strides = [1, 1]} : vector<40x128xf32> to vector<20x128xf32>
    %c0_5 = arith.constant 0 : index
    %c0_6 = arith.constant 0 : index
    %25 = vector.load %arg4[%c0_5, %c0_6] : memref<40x20xf32, #tpu.memory_space<vmem>>, vector<40x20xf32>
    %cst = arith.constant dense<0.000000e+00> : vector<40x128xf32>
    %26 = tpu.matmul %25, %23, %cst {dimension_numbers = #tpu.dot_dimension_numbers<[1], [0], [0], [1], [0, 0, 1, 1], [], []>} : vector<40x20xf32>, vector<20x128xf32>, vector<40x128xf32> -> vector<40x128xf32>
    %c0_7 = arith.constant 0 : index
    %c0_8 = arith.constant 0 : index
    %27 = vector.load %arg5[%c0_7, %c0_8] : memref<40x1xf32, #tpu.memory_space<vmem>>, vector<40x1xf32>
    %28 = vector.broadcast %27 : vector<40x1xf32> to vector<40x128xf32>
    %29 = arith.addf %26, %28 : vector<40x128xf32>
    %30 = vector.extract_strided_slice %29 {offsets = [0, 0], sizes = [20, 128], strides = [1, 1]} : vector<40x128xf32> to vector<20x128xf32>
    %31 = vector.extract_strided_slice %29 {offsets = [20, 0], sizes = [20, 128], strides = [1, 1]} : vector<40x128xf32> to vector<20x128xf32>
    %c0_9 = arith.constant 0 : index
    %c0_10 = arith.constant 0 : index
    %32 = vector.load %arg6[%c0_9, %c0_10] : memref<20x20xf32, #tpu.memory_space<vmem>>, vector<20x20xf32>
    %cst_11 = arith.constant dense<0.000000e+00> : vector<20x128xf32>
    %33 = tpu.matmul %32, %24, %cst_11 {dimension_numbers = #tpu.dot_dimension_numbers<[1], [0], [0], [1], [0, 0, 1, 1], [], []>} : vector<20x20xf32>, vector<20x128xf32>, vector<20x128xf32> -> vector<20x128xf32>
    %c0_12 = arith.constant 0 : index
    %c0_13 = arith.constant 0 : index
    %34 = vector.load %arg7[%c0_12, %c0_13] : memref<20x1xf32, #tpu.memory_space<vmem>>, vector<20x1xf32>
    %35 = vector.broadcast %34 : vector<20x1xf32> to vector<20x128xf32>
    %36 = arith.addf %33, %35 : vector<20x128xf32>
    %37 = math.sin %36 : vector<20x128xf32>
    %38 = arith.mulf %37, %31 : vector<20x128xf32>
    %39 = arith.addf %30, %38 : vector<20x128xf32>
    %c0_14 = arith.constant 0 : index
    %c0_15 = arith.constant 0 : index
    %40 = vector.load %arg8[%c0_14, %c0_15] : memref<20x20xf32, #tpu.memory_space<vmem>>, vector<20x20xf32>
    %cst_16 = arith.constant dense<0.000000e+00> : vector<20x128xf32>
    %41 = tpu.matmul %40, %39, %cst_16 {dimension_numbers = #tpu.dot_dimension_numbers<[1], [0], [0], [1], [0, 0, 1, 1], [], []>} : vector<20x20xf32>, vector<20x128xf32>, vector<20x128xf32> -> vector<20x128xf32>
    %c0_17 = arith.constant 0 : index
    %c0_18 = arith.constant 0 : index
    %42 = vector.load %arg9[%c0_17, %c0_18] : memref<20x1xf32, #tpu.memory_space<vmem>>, vector<20x1xf32>
    %43 = vector.broadcast %42 : vector<20x1xf32> to vector<20x128xf32>
    %44 = arith.addf %41, %43 : vector<20x128xf32>
    %45 = math.sin %44 : vector<20x128xf32>
    %46 = arith.mulf %45, %31 : vector<20x128xf32>
    %47 = arith.addf %30, %46 : vector<20x128xf32>
    %c0_19 = arith.constant 0 : index
    %c0_20 = arith.constant 0 : index
    %48 = vector.load %arg10[%c0_19, %c0_20] : memref<20x20xf32, #tpu.memory_space<vmem>>, vector<20x20xf32>
    %cst_21 = arith.constant dense<0.000000e+00> : vector<20x128xf32>
    %49 = tpu.matmul %48, %47, %cst_21 {dimension_numbers = #tpu.dot_dimension_numbers<[1], [0], [0], [1], [0, 0, 1, 1], [], []>} : vector<20x20xf32>, vector<20x128xf32>, vector<20x128xf32> -> vector<20x128xf32>
    %c0_22 = arith.constant 0 : index
    %c0_23 = arith.constant 0 : index
    %50 = vector.load %arg11[%c0_22, %c0_23] : memref<20x1xf32, #tpu.memory_space<vmem>>, vector<20x1xf32>
    %51 = vector.broadcast %50 : vector<20x1xf32> to vector<20x128xf32>
    %52 = arith.addf %49, %51 : vector<20x128xf32>
    %53 = math.sin %52 : vector<20x128xf32>
    %54 = arith.mulf %53, %31 : vector<20x128xf32>
    %55 = arith.addf %30, %54 : vector<20x128xf32>
    %c0_24 = arith.constant 0 : index
    %c0_25 = arith.constant 0 : index
    %56 = vector.load %arg12[%c0_24, %c0_25] : memref<1x20xf32, #tpu.memory_space<vmem>>, vector<1x20xf32>
    %cst_26 = arith.constant dense<0.000000e+00> : vector<1x128xf32>
    %57 = tpu.matmul %56, %55, %cst_26 {dimension_numbers = #tpu.dot_dimension_numbers<[1], [0], [0], [1], [0, 0, 1, 1], [], []>} : vector<1x20xf32>, vector<20x128xf32>, vector<1x128xf32> -> vector<1x128xf32>
    %c0_27 = arith.constant 0 : index
    %c0_28 = arith.constant 0 : index
    %58 = vector.load %arg13[%c0_27, %c0_28] : memref<1x1xf32, #tpu.memory_space<vmem>>, vector<1x1xf32>
    %59 = vector.broadcast %58 : vector<1x1xf32> to vector<1x128xf32>
    %60 = arith.addf %57, %59 : vector<1x128xf32>
    %c0_29 = arith.constant 0 : index
    %c0_30 = arith.constant 0 : index
    %61 = vector.load %arg14[%c0_29, %c0_30] : memref<1x128xf32, #tpu.memory_space<vmem>>, vector<1x128xf32>
    tpu.vector_store %arg14[%c0_29, %c0_30], %60 {strides = array<i32>} : memref<1x128xf32, #tpu.memory_space<vmem>>, vector<1x128xf32>,
    return
  }
  func.func @transform_0(%arg0: i32) -> (i32, i32) {
    %c0_i32 = arith.constant 0 : i32
    %c0_i32_0 = arith.constant 0 : i32
    return %c0_i32, %arg0 : i32, i32
  }
  func.func @transform_1(%arg0: i32) -> (i32, i32) {
    %c0_i32 = arith.constant 0 : i32
    %c0_i32_0 = arith.constant 0 : i32
    %c0_i32_1 = arith.constant 0 : i32
    return %c0_i32, %c0_i32_0 : i32, i32
  }
  func.func @transform_2(%arg0: i32) -> (i32, i32) {
    %c0_i32 = arith.constant 0 : i32
    %c0_i32_0 = arith.constant 0 : i32
    %c0_i32_1 = arith.constant 0 : i32
    return %c0_i32, %c0_i32_0 : i32, i32
  }
  func.func @transform_3(%arg0: i32) -> (i32, i32) {
    %c0_i32 = arith.constant 0 : i32
    %c0_i32_0 = arith.constant 0 : i32
    %c0_i32_1 = arith.constant 0 : i32
    return %c0_i32, %c0_i32_0 : i32, i32
  }
  func.func @transform_4(%arg0: i32) -> (i32, i32) {
    %c0_i32 = arith.constant 0 : i32
    %c0_i32_0 = arith.constant 0 : i32
    %c0_i32_1 = arith.constant 0 : i32
    return %c0_i32, %c0_i32_0 : i32, i32
  }
  func.func @transform_5(%arg0: i32) -> (i32, i32) {
    %c0_i32 = arith.constant 0 : i32
    %c0_i32_0 = arith.constant 0 : i32
    %c0_i32_1 = arith.constant 0 : i32
    return %c0_i32, %c0_i32_0 : i32, i32
  }
  func.func @transform_6(%arg0: i32) -> (i32, i32) {
    %c0_i32 = arith.constant 0 : i32
    %c0_i32_0 = arith.constant 0 : i32
    %c0_i32_1 = arith.constant 0 : i32
    return %c0_i32, %c0_i32_0 : i32, i32
  }
  func.func @transform_7(%arg0: i32) -> (i32, i32) {
    %c0_i32 = arith.constant 0 : i32
    %c0_i32_0 = arith.constant 0 : i32
    %c0_i32_1 = arith.constant 0 : i32
    return %c0_i32, %c0_i32_0 : i32, i32
  }
  func.func @transform_8(%arg0: i32) -> (i32, i32) {
    %c0_i32 = arith.constant 0 : i32
    %c0_i32_0 = arith.constant 0 : i32
    %c0_i32_1 = arith.constant 0 : i32
    return %c0_i32, %c0_i32_0 : i32, i32
  }
  func.func @transform_9(%arg0: i32) -> (i32, i32) {
    %c0_i32 = arith.constant 0 : i32
    %c0_i32_0 = arith.constant 0 : i32
    %c0_i32_1 = arith.constant 0 : i32
    return %c0_i32, %c0_i32_0 : i32, i32
  }
  func.func @transform_10(%arg0: i32) -> (i32, i32) {
    %c0_i32 = arith.constant 0 : i32
    %c0_i32_0 = arith.constant 0 : i32
    %c0_i32_1 = arith.constant 0 : i32
    return %c0_i32, %c0_i32_0 : i32, i32
  }
  func.func @transform_11(%arg0: i32) -> (i32, i32) {
    %c0_i32 = arith.constant 0 : i32
    %c0_i32_0 = arith.constant 0 : i32
    %c0_i32_1 = arith.constant 0 : i32
    return %c0_i32, %c0_i32_0 : i32, i32
  }
  func.func @transform_12(%arg0: i32) -> (i32, i32) {
    %c0_i32 = arith.constant 0 : i32
    %c0_i32_0 = arith.constant 0 : i32
    %c0_i32_1 = arith.constant 0 : i32
    return %c0_i32, %c0_i32_0 : i32, i32
  }
  func.func @transform_13(%arg0: i32) -> (i32, i32) {
    %c0_i32 = arith.constant 0 : i32
    %c0_i32_0 = arith.constant 0 : i32
    return %c0_i32, %arg0 : i32, i32
  }
}

</mosaic_0001>

<llo_original>
// kernel: sub.2
$region0: #{sub.2}
  #allocation0 [shape = 's32[1]{0}', space=sflag, size = 0x4, scoped, tag = 'scoped memory for sub.2']
  %s0 = inlined_call_operand.vmem [shape: f32[20,20], index: 0, kind: input, shape index: {}]
  %s1 = inlined_call_operand.vmem [shape: f32[20,20], index: 1, kind: input, shape index: {}]
  %s2 = inlined_call_operand.vmem [shape: f32[20,20], index: 2, kind: output, shape index: {}]
  %v3 = vld [vmem:[%s0] sm:$0xff]
  %v4 = vld [vmem:[%s1] sm:$0xff]
  %5 = xla_tuple %v3, %v4
  %6 = xla_tuple %5
  %v7 = vsub.f32 %v3, %v4
  %8 = xla_tuple %v7
  %9 = vst [vmem:[%s2] sm:$0xff] %v7
  %s10 = scalar_lea.vmem %s0, 8
  %v11 = vld [vmem:[%s10] sm:$0xff]
  %s12 = scalar_lea.vmem %s1, 8
  %v13 = vld [vmem:[%s12] sm:$0xff]
  %14 = xla_tuple %v11, %v13
  %15 = xla_tuple %14
  %v16 = vsub.f32 %v11, %v13
  %17 = xla_tuple %v16
  %s18 = scalar_lea.vmem %s2, 8
  %19 = vst [vmem:[%s18] sm:$0xff] %v16
  %s20 = scalar_lea.vmem %s0, 16
  %v21 = vld [vmem:[%s20] sm:$0xff]
  %s22 = scalar_lea.vmem %s1, 16
  %v23 = vld [vmem:[%s22] sm:$0xff]
  %24 = xla_tuple %v21, %v23
  %25 = xla_tuple %24
  %v26 = vsub.f32 %v21, %v23
  %27 = xla_tuple %v26
  %s28 = scalar_lea.vmem %s2, 16
  %29 = vst [vmem:[%s28] sm:$0xff] %v26

// kernel: sub.3
$region0: #{sub.3}
  #allocation0 [shape = 's32[1]{0}', space=sflag, size = 0x4, scoped, tag = 'scoped memory for sub.3']
  %s0 = inlined_call_operand.vmem [shape: f32[20,1], index: 0, kind: input, shape index: {}]
  %s1 = inlined_call_operand.vmem [shape: f32[20,1], index: 1, kind: input, shape index: {}]
  %s2 = inlined_call_operand.vmem [shape: f32[20,1], index: 2, kind: output, shape index: {}]
  %v3 = vld [vmem:[%s0] sm:$0x1]
  %v4 = vld [vmem:[%s1] sm:$0x1]
  %5 = xla_tuple %v3, %v4
  %6 = xla_tuple %5
  %v7 = vsub.f32 %v3, %v4
  %8 = xla_tuple %v7
  %9 = vst [vmem:[%s2] sm:$0x1] %v7

// kernel: ffn_forward.1
$region0: #{ffn_forward.1}
  #allocation0 [shape = 'u32[]', space=smem, size = 0x4, offset = 0x4, fixed_abs, tag = 'smem constant byte address 0x4 - core index']
  #allocation1 [shape = 'u32[144,128]{1,0:T(1,128)}', space=vmem, size = 0x12000, scoped, tag = 'internal scratch']
  #allocation2 [shape = 'f32[1,1]{1,0:T(1,128)S(1)}', space=vmem, size = 0x200, scoped, tag = 'scoped memory for ffn_forward.1']
  %s0 = inlined_call_operand.vmem [shape: f32[3,256], index: 0, kind: input, shape index: {}]
  %s1 = inlined_call_operand.vmem [shape: f32[40,3], index: 1, kind: input, shape index: {}]
  %s2 = inlined_call_operand.vmem [shape: f32[40,1], index: 2, kind: input, shape index: {}]
  %s3 = inlined_call_operand.vmem [shape: f32[40,20], index: 3, kind: input, shape index: {}]
  %s4 = inlined_call_operand.vmem [shape: f32[40,1], index: 4, kind: input, shape index: {}]
  %s5 = inlined_call_operand.vmem [shape: f32[20,20], index: 5, kind: input, shape index: {}]
  %s6 = inlined_call_operand.vmem [shape: f32[20,1], index: 6, kind: input, shape index: {}]
  %s7 = inlined_call_operand.vmem [shape: f32[20,20], index: 7, kind: input, shape index: {}]
  %s8 = inlined_call_operand.vmem [shape: f32[20,1], index: 8, kind: input, shape index: {}]
  %s9 = inlined_call_operand.vmem [shape: f32[20,20], index: 9, kind: input, shape index: {}]
  %s10 = inlined_call_operand.vmem [shape: f32[20,1], index: 10, kind: input, shape index: {}]
  %s11 = inlined_call_operand.vmem [shape: f32[1,20], index: 11, kind: input, shape index: {}]
  %s12 = inlined_call_operand.<no memory space> [shape: f32[1,1], index: 12, kind: input, shape index: {}]
  %s13 = inlined_call_operand.hbm [shape: f32[1,256], index: 13, kind: output, shape index: {}]
  %s14 = sld [smem:[#allocation0]]
  $region85: #{ffn_forward.1} parent=0
    _
  %s16 = ssub.s32 1, %s14
  %s17 = scalar_select 0, %s16, %s14
  %v18 = vstv %s12
  %19 = vst [vmem:[#allocation2] sm:$0x1] %v18
  $region1: #{ffn_forward.1} parent=0
    #allocation3 [shape = 'u8[1024]{0}', space=vmem, size = 0x400, scoped, tag = 'output window, operand 0']
    #allocation4 [shape = 's32[2]{0}', space=sflag, size = 0x8, scoped, tag = 'scoped memory for ffn_forward.1']
    %20 = vsyncpa [#allocation4], 0
    %s21 = scalar_lea.sflag [#allocation4], 1
    %22 = vsyncpa %s21, 0
    loop: start=0, step=1, limit=4
    $region2: #{ffn_forward.1} parent=1 // loop_pre_header
      _
    $region3: #{ffn_forward.1} parent=1 // loop_header
      %s24 = sphi 0, %s28
      %p25 = scmp.ge.s32.totalorder %s24, 4
      %s34 = sphi 0, %s36
      %s37 = sphi 0, %s34
      %s38 = sphi 0, %s37
      %s54 = sphi 0, %s38
      %s58 = sphi 0, %s58
      %s60 = sphi 0, %s58
      %s61 = sphi 0, %s60
      %s75 = sphi 0, %s61
      %s79 = sphi 0, %s79
      %s81 = sphi 0, %s79
      %s82 = sphi 0, %s81
      %s96 = sphi 0, %s82
      %s100 = sphi 0, %s100
      %s102 = sphi 0, %s100
      %s103 = sphi 0, %s102
      %s117 = sphi 0, %s103
      %s121 = sphi 0, %s121
      %s123 = sphi 0, %s121
      %s124 = sphi 0, %s123
      %s138 = sphi 0, %s124
      %s142 = sphi 0, %s142
      %s144 = sphi 0, %s142
      %s145 = sphi 0, %s144
      %s159 = sphi 0, %s145
      %s163 = sphi 0, %s163
      %s165 = sphi 0, %s163
      %s166 = sphi 0, %s165
      %s180 = sphi 0, %s166
      %s184 = sphi 0, %s184
      %s186 = sphi 0, %s184
      %s187 = sphi 0, %s186
      %s201 = sphi 0, %s187
      %s205 = sphi 0, %s205
      %s207 = sphi 0, %s205
      %s208 = sphi 0, %s207
      %s222 = sphi 0, %s208
      %s226 = sphi 0, %s226
      %s228 = sphi 0, %s226
      %s229 = sphi 0, %s228
      %s243 = sphi 0, %s229
      %s247 = sphi 0, %s247
      %s249 = sphi 0, %s247
      %s250 = sphi 0, %s249
      %s264 = sphi 0, %s250
      %s268 = sphi 0, %s268
      %s270 = sphi 0, %s268
      %s271 = sphi 0, %s270
      %s285 = sphi 0, %s271
      %s289 = sphi 0, %s289
      %s291 = sphi 0, %s289
      %s292 = sphi 0, %s291
      %s306 = sphi 0, %s292
      %s312 = sphi 0, %s314
      %s315 = sphi 0, %s312
      %s316 = sphi 0, %s315
      %s332 = sphi 0, %s316
    $region4: #{ffn_forward.1} parent=1 // loop_header_branch
      %27 = sbr.rel (%p25) target = $region8
    $region5: #{ffn_forward.1} parent=1 // loop_body
      %s29 = ssub.s32 %s24, 1
      %s30 = ssub.s32 %s24, 2
      %s31 = sadd.s32 %s24, 1
      %s32 = ssub.s32 %s24, %s31
      %p33 = scmp.eq.s32.totalorder %s32, 0
      %s35 = sadd.s32 %s34, 1
      %s36 = scalar_select %p33, %s34, %s35
      %p39 = pneg %p33
      %p40 = scmp.eq.s32.totalorder %s24, 1
      %p41 = por %p39, %p40
      %p42 = scmp.ne.s32.totalorder %s34, %s37
      %p43 = scmp.eq.s32.totalorder %s24, 0
      %p44 = por %p42, %p43
      %p45 = scmp.ne.s32.totalorder %s34, %s37
      %p46 = scmp.eq.s32.totalorder %s29, 1
      %p47 = por %p45, %p46
      %p48 = scmp.ne.s32.totalorder %s37, %s38
      %p49 = scmp.eq.s32.totalorder %s29, 0
      %p50 = por %p48, %p49
      %p51 = scmp.ne.s32.totalorder %s37, %s38
      %p52 = scmp.eq.s32.totalorder %s30, 1
      %p53 = por %p51, %p52
      %p55 = scmp.ne.s32.totalorder %s38, %s54
      %p56 = scmp.eq.s32.totalorder %s30, 0
      %p57 = por %p55, %p56
      %s59 = sadd.s32 %s58, 1
      %p62 = scmp.eq.s32.totalorder %s24, 1
      %p63 = scmp.ne.s32.totalorder %s58, %s60
      %p64 = scmp.eq.s32.totalorder %s24, 0
      %p65 = por %p63, %p64
      %p66 = scmp.ne.s32.totalorder %s58, %s60
      %p67 = scmp.eq.s32.totalorder %s29, 1
      %p68 = por %p66, %p67
      %p69 = scmp.ne.s32.totalorder %s60, %s61
      %p70 = scmp.eq.s32.totalorder %s29, 0
      %p71 = por %p69, %p70
      %p72 = scmp.ne.s32.totalorder %s60, %s61
      %p73 = scmp.eq.s32.totalorder %s30, 1
      %p74 = por %p72, %p73
      %p76 = scmp.ne.s32.totalorder %s61, %s75
      %p77 = scmp.eq.s32.totalorder %s30, 0
      %p78 = por %p76, %p77
      %s80 = sadd.s32 %s79, 1
      %p83 = scmp.eq.s32.totalorder %s24, 1
      %p84 = scmp.ne.s32.totalorder %s79, %s81
      %p85 = scmp.eq.s32.totalorder %s24, 0
      %p86 = por %p84, %p85
      %p87 = scmp.ne.s32.totalorder %s79, %s81
      %p88 = scmp.eq.s32.totalorder %s29, 1
      %p89 = por %p87, %p88
      %p90 = scmp.ne.s32.totalorder %s81, %s82
      %p91 = scmp.eq.s32.totalorder %s29, 0
      %p92 = por %p90, %p91
      %p93 = scmp.ne.s32.totalorder %s81, %s82
      %p94 = scmp.eq.s32.totalorder %s30, 1
      %p95 = por %p93, %p94
      %p97 = scmp.ne.s32.totalorder %s82, %s96
      %p98 = scmp.eq.s32.totalorder %s30, 0
      %p99 = por %p97, %p98
      %s101 = sadd.s32 %s100, 1
      %p104 = scmp.eq.s32.totalorder %s24, 1
      %p105 = scmp.ne.s32.totalorder %s100, %s102
      %p106 = scmp.eq.s32.totalorder %s24, 0
      %p107 = por %p105, %p106
      %p108 = scmp.ne.s32.totalorder %s100, %s102
      %p109 = scmp.eq.s32.totalorder %s29, 1
      %p110 = por %p108, %p109
      %p111 = scmp.ne.s32.totalorder %s102, %s103
      %p112 = scmp.eq.s32.totalorder %s29, 0
      %p113 = por %p111, %p112
      %p114 = scmp.ne.s32.totalorder %s102, %s103
      %p115 = scmp.eq.s32.totalorder %s30, 1
      %p116 = por %p114, %p115
      %p118 = scmp.ne.s32.totalorder %s103, %s117
      %p119 = scmp.eq.s32.totalorder %s30, 0
      %p120 = por %p118, %p119
      %s122 = sadd.s32 %s121, 1
      %p125 = scmp.eq.s32.totalorder %s24, 1
      %p126 = scmp.ne.s32.totalorder %s121, %s123
      %p127 = scmp.eq.s32.totalorder %s24, 0
      %p128 = por %p126, %p127
      %p129 = scmp.ne.s32.totalorder %s121, %s123
      %p130 = scmp.eq.s32.totalorder %s29, 1
      %p131 = por %p129, %p130
      %p132 = scmp.ne.s32.totalorder %s123, %s124
      %p133 = scmp.eq.s32.totalorder %s29, 0
      %p134 = por %p132, %p133
      %p135 = scmp.ne.s32.totalorder %s123, %s124
      %p136 = scmp.eq.s32.totalorder %s30, 1
      %p137 = por %p135, %p136
      %p139 = scmp.ne.s32.totalorder %s124, %s138
      %p140 = scmp.eq.s32.totalorder %s30, 0
      %p141 = por %p139, %p140
      %s143 = sadd.s32 %s142, 1
      %p146 = scmp.eq.s32.totalorder %s24, 1
      %p147 = scmp.ne.s32.totalorder %s142, %s144
      %p148 = scmp.eq.s32.totalorder %s24, 0
      %p149 = por %p147, %p148
      %p150 = scmp.ne.s32.totalorder %s142, %s144
      %p151 = scmp.eq.s32.totalorder %s29, 1
      %p152 = por %p150, %p151
      %p153 = scmp.ne.s32.totalorder %s144, %s145
      %p154 = scmp.eq.s32.totalorder %s29, 0
      %p155 = por %p153, %p154
      %p156 = scmp.ne.s32.totalorder %s144, %s145
      %p157 = scmp.eq.s32.totalorder %s30, 1
      %p158 = por %p156, %p157
      %p160 = scmp.ne.s32.totalorder %s145, %s159
      %p161 = scmp.eq.s32.totalorder %s30, 0
      %p162 = por %p160, %p161
      %s164 = sadd.s32 %s163, 1
      %p167 = scmp.eq.s32.totalorder %s24, 1
      %p168 = scmp.ne.s32.totalorder %s163, %s165
      %p169 = scmp.eq.s32.totalorder %s24, 0
      %p170 = por %p168, %p169
      %p171 = scmp.ne.s32.totalorder %s163, %s165
      %p172 = scmp.eq.s32.totalorder %s29, 1
      %p173 = por %p171, %p172
      %p174 = scmp.ne.s32.totalorder %s165, %s166
      %p175 = scmp.eq.s32.totalorder %s29, 0
      %p176 = por %p174, %p175
      %p177 = scmp.ne.s32.totalorder %s165, %s166
      %p178 = scmp.eq.s32.totalorder %s30, 1
      %p179 = por %p177, %p178
      %p181 = scmp.ne.s32.totalorder %s166, %s180
      %p182 = scmp.eq.s32.totalorder %s30, 0
      %p183 = por %p181, %p182
      %s185 = sadd.s32 %s184, 1
      %p188 = scmp.eq.s32.totalorder %s24, 1
      %p189 = scmp.ne.s32.totalorder %s184, %s186
      %p190 = scmp.eq.s32.totalorder %s24, 0
      %p191 = por %p189, %p190
      %p192 = scmp.ne.s32.totalorder %s184, %s186
      %p193 = scmp.eq.s32.totalorder %s29, 1
      %p194 = por %p192, %p193
      %p195 = scmp.ne.s32.totalorder %s186, %s187
      %p196 = scmp.eq.s32.totalorder %s29, 0
      %p197 = por %p195, %p196
      %p198 = scmp.ne.s32.totalorder %s186, %s187
      %p199 = scmp.eq.s32.totalorder %s30, 1
      %p200 = por %p198, %p199
      %p202 = scmp.ne.s32.totalorder %s187, %s201
      %p203 = scmp.eq.s32.totalorder %s30, 0
      %p204 = por %p202, %p203
      %s206 = sadd.s32 %s205, 1
      %p209 = scmp.eq.s32.totalorder %s24, 1
      %p210 = scmp.ne.s32.totalorder %s205, %s207
      %p211 = scmp.eq.s32.totalorder %s24, 0
      %p212 = por %p210, %p211
      %p213 = scmp.ne.s32.totalorder %s205, %s207
      %p214 = scmp.eq.s32.totalorder %s29, 1
      %p215 = por %p213, %p214
      %p216 = scmp.ne.s32.totalorder %s207, %s208
      %p217 = scmp.eq.s32.totalorder %s29, 0
      %p218 = por %p216, %p217
      %p219 = scmp.ne.s32.totalorder %s207, %s208
      %p220 = scmp.eq.s32.totalorder %s30, 1
      %p221 = por %p219, %p220
      %p223 = scmp.ne.s32.totalorder %s208, %s222
      %p224 = scmp.eq.s32.totalorder %s30, 0
      %p225 = por %p223, %p224
      %s227 = sadd.s32 %s226, 1
      %p230 = scmp.eq.s32.totalorder %s24, 1
      %p231 = scmp.ne.s32.totalorder %s226, %s228
      %p232 = scmp.eq.s32.totalorder %s24, 0
      %p233 = por %p231, %p232
      %p234 = scmp.ne.s32.totalorder %s226, %s228
      %p235 = scmp.eq.s32.totalorder %s29, 1
      %p236 = por %p234, %p235
      %p237 = scmp.ne.s32.totalorder %s228, %s229
      %p238 = scmp.eq.s32.totalorder %s29, 0
      %p239 = por %p237, %p238
      %p240 = scmp.ne.s32.totalorder %s228, %s229
      %p241 = scmp.eq.s32.totalorder %s30, 1
      %p242 = por %p240, %p241
      %p244 = scmp.ne.s32.totalorder %s229, %s243
      %p245 = scmp.eq.s32.totalorder %s30, 0
      %p246 = por %p244, %p245
      %s248 = sadd.s32 %s247, 1
      %p251 = scmp.eq.s32.totalorder %s24, 1
      %p252 = scmp.ne.s32.totalorder %s247, %s249
      %p253 = scmp.eq.s32.totalorder %s24, 0
      %p254 = por %p252, %p253
      %p255 = scmp.ne.s32.totalorder %s247, %s249
      %p256 = scmp.eq.s32.totalorder %s29, 1
      %p257 = por %p255, %p256
      %p258 = scmp.ne.s32.totalorder %s249, %s250
      %p259 = scmp.eq.s32.totalorder %s29, 0
      %p260 = por %p258, %p259
      %p261 = scmp.ne.s32.totalorder %s249, %s250
      %p262 = scmp.eq.s32.totalorder %s30, 1
      %p263 = por %p261, %p262
      %p265 = scmp.ne.s32.totalorder %s250, %s264
      %p266 = scmp.eq.s32.totalorder %s30, 0
      %p267 = por %p265, %p266
      %s269 = sadd.s32 %s268, 1
      %p272 = scmp.eq.s32.totalorder %s24, 1
      %p273 = scmp.ne.s32.totalorder %s268, %s270
      %p274 = scmp.eq.s32.totalorder %s24, 0
      %p275 = por %p273, %p274
      %p276 = scmp.ne.s32.totalorder %s268, %s270
      %p277 = scmp.eq.s32.totalorder %s29, 1
      %p278 = por %p276, %p277
      %p279 = scmp.ne.s32.totalorder %s270, %s271
      %p280 = scmp.eq.s32.totalorder %s29, 0
      %p281 = por %p279, %p280
      %p282 = scmp.ne.s32.totalorder %s270, %s271
      %p283 = scmp.eq.s32.totalorder %s30, 1
      %p284 = por %p282, %p283
      %p286 = scmp.ne.s32.totalorder %s271, %s285
      %p287 = scmp.eq.s32.totalorder %s30, 0
      %p288 = por %p286, %p287
      %s290 = sadd.s32 %s289, 1
      %p293 = scmp.eq.s32.totalorder %s24, 1
      %p294 = scmp.ne.s32.totalorder %s289, %s291
      %p295 = scmp.eq.s32.totalorder %s24, 0
      %p296 = por %p294, %p295
      %p297 = scmp.ne.s32.totalorder %s289, %s291
      %p298 = scmp.eq.s32.totalorder %s29, 1
      %p299 = por %p297, %p298
      %p300 = scmp.ne.s32.totalorder %s291, %s292
      %p301 = scmp.eq.s32.totalorder %s29, 0
      %p302 = por %p300, %p301
      %p303 = scmp.ne.s32.totalorder %s291, %s292
      %p304 = scmp.eq.s32.totalorder %s30, 1
      %p305 = por %p303, %p304
      %p307 = scmp.ne.s32.totalorder %s292, %s306
      %p308 = scmp.eq.s32.totalorder %s30, 0
      %p309 = por %p307, %p308
      %s310 = ssub.s32 %s24, %s31
      %p311 = scmp.eq.s32.totalorder %s310, 0
      %s313 = sadd.s32 %s312, 1
      %s314 = scalar_select %p311, %s312, %s313
      %p317 = pneg %p311
      %p318 = scmp.eq.s32.totalorder %s24, 1
      %p319 = por %p317, %p318
      %p320 = scmp.ne.s32.totalorder %s312, %s315
      %p321 = scmp.eq.s32.totalorder %s24, 0
      %p322 = por %p320, %p321
      %p323 = scmp.ne.s32.totalorder %s312, %s315
      %p324 = scmp.eq.s32.totalorder %s29, 1
      %p325 = por %p323, %p324
      %p326 = scmp.ne.s32.totalorder %s315, %s316
      %p327 = scmp.eq.s32.totalorder %s29, 0
      %p328 = por %p326, %p327
      %p329 = scmp.ne.s32.totalorder %s315, %s316
      %p330 = scmp.eq.s32.totalorder %s30, 1
      %p331 = por %p329, %p330
      %p333 = scmp.ne.s32.totalorder %s316, %s332
      %p334 = scmp.eq.s32.totalorder %s30, 0
      %p335 = por %p333, %p334
      %p336 = scmp.le.s32.totalorder 1, %s24
      %p337 = scmp.lt.s32.totalorder %s24, 3
      %p338 = pnand %p336, %p337
      %p339 = pneg %p338
      // Predicated region
      $region9: #{ffn_forward.1} parent=5 // pred_check
        _
      $region10: #{ffn_forward.1} parent=5 // pred_check_branch
        %341 = sbr.rel (%p338) target = $region12
      $region11: #{ffn_forward.1} parent=5 // pred_region
        %s342 = ssub.s32 %s24, 1
        // Predicated region
        $region13: #{ffn_forward.1} parent=11 // pred_check
          %p343 = pneg %p71
        $region14: #{ffn_forward.1} parent=11 // pred_check_branch
          %345 = sbr.rel (%p343) target = $region16
        $region15: #{ffn_forward.1} parent=11 // pred_region
          _
        $region16: #{ffn_forward.1} parent=11 // pred_fallthru
          _
        // Predicated region
        $region17: #{ffn_forward.1} parent=11 // pred_check
          %p346 = pneg %p92
        $region18: #{ffn_forward.1} parent=11 // pred_check_branch
          %348 = sbr.rel (%p346) target = $region20
        $region19: #{ffn_forward.1} parent=11 // pred_region
          _
        $region20: #{ffn_forward.1} parent=11 // pred_fallthru
          _
        // Predicated region
        $region21: #{ffn_forward.1} parent=11 // pred_check
          %p349 = pneg %p113
        $region22: #{ffn_forward.1} parent=11 // pred_check_branch
          %351 = sbr.rel (%p349) target = $region24
        $region23: #{ffn_forward.1} parent=11 // pred_region
          _
        $region24: #{ffn_forward.1} parent=11 // pred_fallthru
          _
        // Predicated region
        $region25: #{ffn_forward.1} parent=11 // pred_check
          %p352 = pneg %p134
        $region26: #{ffn_forward.1} parent=11 // pred_check_branch
          %354 = sbr.rel (%p352) target = $region28
        $region27: #{ffn_forward.1} parent=11 // pred_region
          _
        $region28: #{ffn_forward.1} parent=11 // pred_fallthru
          _
        // Predicated region
        $region29: #{ffn_forward.1} parent=11 // pred_check
          %p355 = pneg %p155
        $region30: #{ffn_forward.1} parent=11 // pred_check_branch
          %357 = sbr.rel (%p355) target = $region32
        $region31: #{ffn_forward.1} parent=11 // pred_region
          _
        $region32: #{ffn_forward.1} parent=11 // pred_fallthru
          _
        // Predicated region
        $region33: #{ffn_forward.1} parent=11 // pred_check
          %p358 = pneg %p176
        $region34: #{ffn_forward.1} parent=11 // pred_check_branch
          %360 = sbr.rel (%p358) target = $region36
        $region35: #{ffn_forward.1} parent=11 // pred_region
          _
        $region36: #{ffn_forward.1} parent=11 // pred_fallthru
          _
        // Predicated region
        $region37: #{ffn_forward.1} parent=11 // pred_check
          %p361 = pneg %p197
        $region38: #{ffn_forward.1} parent=11 // pred_check_branch
          %363 = sbr.rel (%p361) target = $region40
        $region39: #{ffn_forward.1} parent=11 // pred_region
          _
        $region40: #{ffn_forward.1} parent=11 // pred_fallthru
          _
        // Predicated region
        $region41: #{ffn_forward.1} parent=11 // pred_check
          %p364 = pneg %p218
        $region42: #{ffn_forward.1} parent=11 // pred_check_branch
          %366 = sbr.rel (%p364) target = $region44
        $region43: #{ffn_forward.1} parent=11 // pred_region
          _
        $region44: #{ffn_forward.1} parent=11 // pred_fallthru
          _
        // Predicated region
        $region45: #{ffn_forward.1} parent=11 // pred_check
          %p367 = pneg %p239
        $region46: #{ffn_forward.1} parent=11 // pred_check_branch
          %369 = sbr.rel (%p367) target = $region48
        $region47: #{ffn_forward.1} parent=11 // pred_region
          _
        $region48: #{ffn_forward.1} parent=11 // pred_fallthru
          _
        // Predicated region
        $region49: #{ffn_forward.1} parent=11 // pred_check
          %p370 = pneg %p260
        $region50: #{ffn_forward.1} parent=11 // pred_check_branch
          %372 = sbr.rel (%p370) target = $region52
        $region51: #{ffn_forward.1} parent=11 // pred_region
          _
        $region52: #{ffn_forward.1} parent=11 // pred_fallthru
          _
        // Predicated region
        $region53: #{ffn_forward.1} parent=11 // pred_check
          %p373 = pneg %p281
        $region54: #{ffn_forward.1} parent=11 // pred_check_branch
          %375 = sbr.rel (%p373) target = $region56
        $region55: #{ffn_forward.1} parent=11 // pred_region
          _
        $region56: #{ffn_forward.1} parent=11 // pred_fallthru
          _
        // Predicated region
        $region57: #{ffn_forward.1} parent=11 // pred_check
          %p376 = pneg %p302
        $region58: #{ffn_forward.1} parent=11 // pred_check_branch
          %378 = sbr.rel (%p376) target = $region60
        $region59: #{ffn_forward.1} parent=11 // pred_region
          _
        $region60: #{ffn_forward.1} parent=11 // pred_fallthru
          _
      $region12: #{ffn_forward.1} parent=5 // pred_fallthru
        _
      %p379 = scmp.lt.s32.totalorder %s24, 2
      // Predicated region
      $region61: #{ffn_forward.1} parent=5 // pred_check
        %p380 = pneg %p379
      $region62: #{ffn_forward.1} parent=5 // pred_check_branch
        %382 = sbr.rel (%p380) target = $region64
      $region63: #{ffn_forward.1} parent=5 // pred_region
        // Predicated region
        $region65: #{ffn_forward.1} parent=63 // pred_check
          %p383 = pneg %p44
        $region66: #{ffn_forward.1} parent=63 // pred_check_branch
          %385 = sbr.rel (%p383) target = $region68
        $region67: #{ffn_forward.1} parent=63 // pred_region
          %p386 = scmp.lt.s32.totalorder %s24, 1
          %s387 = scalar_select %p386, %s24, 1
          %s388 = smul.addr %s387, 4
          %s389 = scalar_lea.vmem %s0, %s388
        $region68: #{ffn_forward.1} parent=63 // pred_fallthru
          _
      $region64: #{ffn_forward.1} parent=5 // pred_fallthru
        _
      %p390 = scmp.le.s32.totalorder 1, %s24
      %p391 = scmp.lt.s32.totalorder %s24, 3
      %p392 = pnand %p390, %p391
      %p393 = pneg %p392
      // Predicated region
      $region69: #{ffn_forward.1} parent=5 // pred_check
        _
      $region70: #{ffn_forward.1} parent=5 // pred_check_branch
        %395 = sbr.rel (%p392) target = $region72
      $region71: #{ffn_forward.1} parent=5 // pred_region
        %s396 = ssub.s32 %s24, 1
        %p397 = scmp.lt.s32.totalorder %s29, 1
        %s398 = scalar_select %p397, %s29, 1
        %s399 = smul.addr %s398, 4
        %s400 = scalar_lea.vmem %s0, %s399
        %p401 = pneg %p50
        %p402 = pneg %p47
        %p403 = pneg %p71
        %p404 = pneg %p68
        %p405 = pneg %p92
        %p406 = pneg %p89
        %p407 = pneg %p113
        %p408 = pneg %p110
        %p409 = pneg %p134
        %p410 = pneg %p131
        %p411 = pneg %p155
        %p412 = pneg %p152
        %p413 = pneg %p176
        %p414 = pneg %p173
        %p415 = pneg %p197
        %p416 = pneg %p194
        %p417 = pneg %p218
        %p418 = pneg %p215
        %p419 = pneg %p239
        %p420 = pneg %p236
        %p421 = pneg %p260
        %p422 = pneg %p257
        %p423 = pneg %p281
        %p424 = pneg %p278
        %p425 = pneg %p302
        %p426 = pneg %p299
        %p427 = pneg %p328
        %p428 = pneg %p325
        %s429 = sand.u32 %s315, 1
        %s430 = scalar_lea.sflag [#allocation4], %s429
        %s431 = sand.u32 %s315, 1
        %s432 = scalar_lea.vmem [#allocation3], %s431
        %p433 = scmp.lt.s32.totalorder %s29, 1
        %s434 = scalar_select %p433, %s29, 1
        %s435 = smul.addr %s434, 4
        %s436 = scalar_lea.vmem %s0, %s435
        %v437 = vld [vmem:[%s436] sm:$0x7]
        %v438 = vld [vmem:[%s1] sm:$0xff]
        %v439 = vld [vmem:[%s1 + $0x8] sm:$0xff]
        %v440 = vld [vmem:[%s1 + $0x10] sm:$0xff]
        %v441 = vld [vmem:[%s1 + $0x18] sm:$0xff]
        %v442 = vld [vmem:[%s1 + $0x20] sm:$0xff]
        %v443 = vld [vmem:[%s2] sm:$0xff]
        %v444 = vld [vmem:[%s2 + $0x8] sm:$0xff]
        %v445 = vld [vmem:[%s2 + $0x10] sm:$0xff]
        %v446 = vld [vmem:[%s2 + $0x18] sm:$0xff]
        %v447 = vld [vmem:[%s2 + $0x20] sm:$0xff]
        %449 = vset.pattern.permute.xlu0 0
        %450 = vperm.xlu0 %449, %v438
        %v451 = vpop.permute.xlu0 %450
        %454 = vset.pattern.permute.xlu0 0
        %455 = vperm.xlu0 %454, %v439
        %v456 = vpop.permute.xlu0 %455
        %459 = vset.pattern.permute.xlu0 0
        %460 = vperm.xlu0 %459, %v440
        %v461 = vpop.permute.xlu0 %460
        %464 = vset.pattern.permute.xlu0 0
        %465 = vperm.xlu0 %464, %v441
        %v466 = vpop.permute.xlu0 %465
        %469 = vset.pattern.permute.xlu0 0
        %470 = vperm.xlu0 %469, %v442
        %v471 = vpop.permute.xlu0 %470
        %v473 = vlaneseq
        %v474 = vshrl.u32 %v473, 7
        %v475 = vsub.s32 0, %v474
        %v476 = vrot.slane %v437, %v475
        %v477 = vmul.f32 %v451, %v476
        %v478 = vmul.f32 %v456, %v476
        %v479 = vmul.f32 %v461, %v476
        %v480 = vmul.f32 %v466, %v476
        %v481 = vmul.f32 %v471, %v476
        %483 = vset.pattern.permute.xlu0 0
        %484 = vperm.xlu0 %483, %v443
        %v485 = vpop.permute.xlu0 %484
        %488 = vset.pattern.permute.xlu0 0
        %489 = vperm.xlu0 %488, %v444
        %v490 = vpop.permute.xlu0 %489
        %493 = vset.pattern.permute.xlu0 0
        %494 = vperm.xlu0 %493, %v445
        %v495 = vpop.permute.xlu0 %494
        %498 = vset.pattern.permute.xlu0 0
        %499 = vperm.xlu0 %498, %v446
        %v500 = vpop.permute.xlu0 %499
        %503 = vset.pattern.permute.xlu0 0
        %504 = vperm.xlu0 %503, %v447
        %v505 = vpop.permute.xlu0 %504
        %v507 = vadd.f32 %v485, %v477
        %v508 = vadd.f32 %v490, %v478
        %v509 = vadd.f32 %v495, %v479
        %v510 = vadd.f32 %v500, %v480
        %v511 = vadd.f32 %v505, %v481
        %512 = vset.pattern.permute.xlu0 1
        %513 = vperm.xlu0 %512, %v438
        %v514 = vpop.permute.xlu0 %513
        %516 = vset.pattern.permute.xlu0 1
        %517 = vperm.xlu0 %516, %v439
        %v518 = vpop.permute.xlu0 %517
        %520 = vset.pattern.permute.xlu0 1
        %521 = vperm.xlu0 %520, %v440
        %v522 = vpop.permute.xlu0 %521
        %524 = vset.pattern.permute.xlu0 1
        %525 = vperm.xlu0 %524, %v441
        %v526 = vpop.permute.xlu0 %525
        %528 = vset.pattern.permute.xlu0 1
        %529 = vperm.xlu0 %528, %v442
        %v530 = vpop.permute.xlu0 %529
        %v532 = vlaneseq
        %v533 = vshrl.u32 %v532, 7
        %v534 = vsub.s32 1, %v533
        %v535 = vrot.slane %v437, %v534
        %v536 = vmul.f32 %v514, %v535
        %v537 = vmul.f32 %v518, %v535
        %v538 = vmul.f32 %v522, %v535
        %v539 = vmul.f32 %v526, %v535
        %v540 = vmul.f32 %v530, %v535
        %v541 = vadd.f32 %v507, %v536
        %v542 = vadd.f32 %v508, %v537
        %v543 = vadd.f32 %v509, %v538
        %v544 = vadd.f32 %v510, %v539
        %v545 = vadd.f32 %v511, %v540
        %546 = vset.pattern.permute.xlu0 2
        %547 = vperm.xlu0 %546, %v438
        %v548 = vpop.permute.xlu0 %547
        %550 = vset.pattern.permute.xlu0 2
        %551 = vperm.xlu0 %550, %v439
        %v552 = vpop.permute.xlu0 %551
        %554 = vset.pattern.permute.xlu0 2
        %555 = vperm.xlu0 %554, %v440
        %v556 = vpop.permute.xlu0 %555
        %558 = vset.pattern.permute.xlu0 2
        %559 = vperm.xlu0 %558, %v441
        %v560 = vpop.permute.xlu0 %559
        %562 = vset.pattern.permute.xlu0 2
        %563 = vperm.xlu0 %562, %v442
        %v564 = vpop.permute.xlu0 %563
        %v566 = vlaneseq
        %v567 = vshrl.u32 %v566, 7
        %v568 = vsub.s32 2, %v567
        %v569 = vrot.slane %v437, %v568
        %v570 = vmul.f32 %v548, %v569
        %v571 = vmul.f32 %v552, %v569
        %v572 = vmul.f32 %v556, %v569
        %v573 = vmul.f32 %v560, %v569
        %v574 = vmul.f32 %v564, %v569
        %v575 = vadd.f32 %v541, %v570
        %v576 = vadd.f32 %v542, %v571
        %v577 = vadd.f32 %v543, %v572
        %v578 = vadd.f32 %v544, %v573
        %v579 = vadd.f32 %v545, %v574
        %v580 = vand.u32 2147483647, %v575
        %vm581 = vcmp.le.f32.partialorder %v580, 0.7853982
        %vm582 = vcmp.lt.s32.totalorder %v575, 0
        %v583 = vand.u32 %v575, 2139095040
        %v584 = vshrl.u32 %v583, 23
        %v585 = vsub.s32 %v584, 127
        %v586 = vand.u32 2147483647, %v575
        %v587 = vand.u32 %v586, 8388607
        %v588 = vor.u32 %v587, 8388608
        %v589 = vsub.s32 0, %v588
        %v590 = vadd.s32 %v585, 1
        %vm591 = vcmp.gt.s32.totalorder %v590, 0
        %v592 = vsel %vm591, %v590, 0
        %v593 = vshrl.u32 %v592, 5
        %v594 = vand.u32 %v592, 31
        %v595 = vsub.s32 32, %v594
        %v596 = vshrl.u32 683565275, %v595
        %v597 = vshll.u32 683565275, %v594
        %v598 = vshrl.u32 2475754826, %v595
        %v599 = vor.u32 %v597, %v598
        %v600 = vshll.u32 2475754826, %v594
        %v601 = vshrl.u32 2131351028, %v595
        %v602 = vor.u32 %v600, %v601
        %v603 = vshll.u32 2131351028, %v594
        %v604 = vshrl.u32 2102212464, %v595
        %v605 = vor.u32 %v603, %v604
        %v606 = vshll.u32 2102212464, %v594
        %v607 = vshrl.u32 920167782, %v595
        %v608 = vor.u32 %v606, %v607
        %v609 = vshll.u32 920167782, %v594
        %v610 = vshrl.u32 1326507024, %v595
        %v611 = vor.u32 %v609, %v610
        %vm612 = vcmp.lt.s32.totalorder %v593, 1
        %vm613 = vcmp.lt.s32.totalorder %v593, 2
        %vm614 = vcmp.lt.s32.totalorder %v593, 3
        %vm615 = vcmp.lt.s32.totalorder %v593, 4
        %v616 = vsel %vm612, %v596, %v599
        %v617 = vsel %vm615, %v605, 2102212464
        %v618 = vsel %vm614, %v602, %v617
        %v619 = vsel %vm613, %v616, %v618
        %v620 = vsel %vm612, %v599, %v602
        %v621 = vsel %vm615, %v608, 920167782
        %v622 = vsel %vm614, %v605, %v621
        %v623 = vsel %vm613, %v620, %v622
        %v624 = vsel %vm612, %v602, %v605
        %v625 = vsel %vm615, %v611, 1326507024
        %v626 = vsel %vm614, %v608, %v625
        %v627 = vsel %vm613, %v624, %v626
        %v628 = vshll.u32 %v588, 8
        %v629 = vmul.u32.u64.compose %v628, %v627
        %v630 = vextract.low.u32 %v629
        %v631 = vextract.high.u32 %v629
        %v632 = vmul.u32.u64.compose %v628, %v623
        %v633 = vextract.low.u32 %v632
        %v634 = vextract.high.u32 %v632
        %v635 = vmul.u32 %v628, %v619
        %v636 = vadd.s32 %v631, %v633
        %vm637 = vc.u32 %v631, %v633
        %v638 = vadd.s32 %v634, 1
        %v639 = vsel %vm637, %v638, %v634
        %v640 = vadd.s32 %v635, %v639
        %v641 = vadd.s32 %v640, 536870912
        %v642 = vshrl.u32 %v641, 30
        %v643 = vshll.u32 %v642, 30
        %v644 = vsub.s32 %v640, %v643
        %vm645 = vcmp.lt.s32.totalorder %v644, 0
        %v646 = vsub.s32 0, %v644
        %v647 = vsel %vm645, %v646, %v644
        %v648 = vclz %v647
        %v649 = vsub.s32 %v648, 2
        %vm650 = vcmp.gt.s32.totalorder 0, %v649
        %v651 = vsel %vm650, 0, %v649
        %v652 = vsub.s32 32, %v651
        %v653 = vshll.u32 %v644, %v651
        %v654 = vshrl.u32 %v636, %v652
        %v655 = vor.u32 %v653, %v654
        %v656 = vsub.s32 4294967266, %v651
        %v657 = vadd.s32 %v656, 127
        %v658 = vshll.u32 %v657, 23
        %v659 = vor.u32 4788187, %v658
        %v660 = vand.u32 2147483647, %v659
        %v662 = vcvt.s32.f32 %v655
        %v663 = vmul.f32 %v662, %v660
        %v664 = vxor.u32 %v663, 2147483648
        %v665 = vsel %vm582, %v664, %v663
        %v666 = vsub.s32 4, %v642
        %v667 = vsel %vm582, %v666, %v642
        %v668 = vsel %vm581, %v575, %v665
        %v669 = vsel %vm581, 0, %v667
        %v670 = vcosq.f32.pop %v668
        %v671 = vsinq.f32.pop %v668
        %vm672 = vweird.f32 %v575
        %v673 = vadd.s32 %v669, 3
        %v674 = vand.u32 %v673, 3
        %vm675 = vcmp.lt.s32.totalorder %v674, 2
        %vm676 = vcmp.eq.s32.totalorder %v674, 0
        %v677 = vxor.u32 %v671, 2147483648
        %v678 = vsel %vm676, %v670, %v677
        %vm679 = vcmp.eq.s32.totalorder %v674, 2
        %v680 = vxor.u32 %v670, 2147483648
        %v681 = vsel %vm679, %v680, %v671
        %v682 = vsel %vm675, %v678, %v681
        %v683 = vsel %vm672, nan, %v682
        %v684 = vand.u32 2147483647, %v576
        %vm685 = vcmp.le.f32.partialorder %v684, 0.7853982
        %vm686 = vcmp.lt.s32.totalorder %v576, 0
        %v687 = vand.u32 %v576, 2139095040
        %v688 = vshrl.u32 %v687, 23
        %v689 = vsub.s32 %v688, 127
        %v690 = vand.u32 2147483647, %v576
        %v691 = vand.u32 %v690, 8388607
        %v692 = vor.u32 %v691, 8388608
        %v693 = vsub.s32 0, %v692
        %v694 = vadd.s32 %v689, 1
        %vm695 = vcmp.gt.s32.totalorder %v694, 0
        %v696 = vsel %vm695, %v694, 0
        %v697 = vshrl.u32 %v696, 5
        %v698 = vand.u32 %v696, 31
        %v699 = vsub.s32 32, %v698
        %v700 = vshrl.u32 683565275, %v699
        %v701 = vshll.u32 683565275, %v698
        %v702 = vshrl.u32 2475754826, %v699
        %v703 = vor.u32 %v701, %v702
        %v704 = vshll.u32 2475754826, %v698
        %v705 = vshrl.u32 2131351028, %v699
        %v706 = vor.u32 %v704, %v705
        %v707 = vshll.u32 2131351028, %v698
        %v708 = vshrl.u32 2102212464, %v699
        %v709 = vor.u32 %v707, %v708
        %v710 = vshll.u32 2102212464, %v698
        %v711 = vshrl.u32 920167782, %v699
        %v712 = vor.u32 %v710, %v711
        %v713 = vshll.u32 920167782, %v698
        %v714 = vshrl.u32 1326507024, %v699
        %v715 = vor.u32 %v713, %v714
        %vm716 = vcmp.lt.s32.totalorder %v697, 1
        %vm717 = vcmp.lt.s32.totalorder %v697, 2
        %vm718 = vcmp.lt.s32.totalorder %v697, 3
        %vm719 = vcmp.lt.s32.totalorder %v697, 4
        %v720 = vsel %vm716, %v700, %v703
        %v721 = vsel %vm719, %v709, 2102212464
        %v722 = vsel %vm718, %v706, %v721
        %v723 = vsel %vm717, %v720, %v722
        %v724 = vsel %vm716, %v703, %v706
        %v725 = vsel %vm719, %v712, 920167782
        %v726 = vsel %vm718, %v709, %v725
        %v727 = vsel %vm717, %v724, %v726
        %v728 = vsel %vm716, %v706, %v709
        %v729 = vsel %vm719, %v715, 1326507024
        %v730 = vsel %vm718, %v712, %v729
        %v731 = vsel %vm717, %v728, %v730
        %v732 = vshll.u32 %v692, 8
        %v733 = vmul.u32.u64.compose %v732, %v731
        %v734 = vextract.low.u32 %v733
        %v735 = vextract.high.u32 %v733
        %v736 = vmul.u32.u64.compose %v732, %v727
        %v737 = vextract.low.u32 %v736
        %v738 = vextract.high.u32 %v736
        %v739 = vmul.u32 %v732, %v723
        %v740 = vadd.s32 %v735, %v737
        %vm741 = vc.u32 %v735, %v737
        %v742 = vadd.s32 %v738, 1
        %v743 = vsel %vm741, %v742, %v738
        %v744 = vadd.s32 %v739, %v743
        %v745 = vadd.s32 %v744, 536870912
        %v746 = vshrl.u32 %v745, 30
        %v747 = vshll.u32 %v746, 30
        %v748 = vsub.s32 %v744, %v747
        %vm749 = vcmp.lt.s32.totalorder %v748, 0
        %v750 = vsub.s32 0, %v748
        %v751 = vsel %vm749, %v750, %v748
        %v752 = vclz %v751
        %v753 = vsub.s32 %v752, 2
        %vm754 = vcmp.gt.s32.totalorder 0, %v753
        %v755 = vsel %vm754, 0, %v753
        %v756 = vsub.s32 32, %v755
        %v757 = vshll.u32 %v748, %v755
        %v758 = vshrl.u32 %v740, %v756
        %v759 = vor.u32 %v757, %v758
        %v760 = vsub.s32 4294967266, %v755
        %v761 = vadd.s32 %v760, 127
        %v762 = vshll.u32 %v761, 23
        %v763 = vor.u32 4788187, %v762
        %v764 = vand.u32 2147483647, %v763
        %v766 = vcvt.s32.f32 %v759
        %v767 = vmul.f32 %v766, %v764
        %v768 = vxor.u32 %v767, 2147483648
        %v769 = vsel %vm686, %v768, %v767
        %v770 = vsub.s32 4, %v746
        %v771 = vsel %vm686, %v770, %v746
        %v772 = vsel %vm685, %v576, %v769
        %v773 = vsel %vm685, 0, %v771
        %v774 = vcosq.f32.pop %v772
        %v775 = vsinq.f32.pop %v772
        %vm776 = vweird.f32 %v576
        %v777 = vadd.s32 %v773, 3
        %v778 = vand.u32 %v777, 3
        %vm779 = vcmp.lt.s32.totalorder %v778, 2
        %vm780 = vcmp.eq.s32.totalorder %v778, 0
        %v781 = vxor.u32 %v775, 2147483648
        %v782 = vsel %vm780, %v774, %v781
        %vm783 = vcmp.eq.s32.totalorder %v778, 2
        %v784 = vxor.u32 %v774, 2147483648
        %v785 = vsel %vm783, %v784, %v775
        %v786 = vsel %vm779, %v782, %v785
        %v787 = vsel %vm776, nan, %v786
        %v788 = vand.u32 2147483647, %v577
        %vm789 = vcmp.le.f32.partialorder %v788, 0.7853982
        %vm790 = vcmp.lt.s32.totalorder %v577, 0
        %v791 = vand.u32 %v577, 2139095040
        %v792 = vshrl.u32 %v791, 23
        %v793 = vsub.s32 %v792, 127
        %v794 = vand.u32 2147483647, %v577
        %v795 = vand.u32 %v794, 8388607
        %v796 = vor.u32 %v795, 8388608
        %v797 = vsub.s32 0, %v796
        %v798 = vadd.s32 %v793, 1
        %vm799 = vcmp.gt.s32.totalorder %v798, 0
        %v800 = vsel %vm799, %v798, 0
        %v801 = vshrl.u32 %v800, 5
        %v802 = vand.u32 %v800, 31
        %v803 = vsub.s32 32, %v802
        %v804 = vshrl.u32 683565275, %v803
        %v805 = vshll.u32 683565275, %v802
        %v806 = vshrl.u32 2475754826, %v803
        %v807 = vor.u32 %v805, %v806
        %v808 = vshll.u32 2475754826, %v802
        %v809 = vshrl.u32 2131351028, %v803
        %v810 = vor.u32 %v808, %v809
        %v811 = vshll.u32 2131351028, %v802
        %v812 = vshrl.u32 2102212464, %v803
        %v813 = vor.u32 %v811, %v812
        %v814 = vshll.u32 2102212464, %v802
        %v815 = vshrl.u32 920167782, %v803
        %v816 = vor.u32 %v814, %v815
        %v817 = vshll.u32 920167782, %v802
        %v818 = vshrl.u32 1326507024, %v803
        %v819 = vor.u32 %v817, %v818
        %vm820 = vcmp.lt.s32.totalorder %v801, 1
        %vm821 = vcmp.lt.s32.totalorder %v801, 2
        %vm822 = vcmp.lt.s32.totalorder %v801, 3
        %vm823 = vcmp.lt.s32.totalorder %v801, 4
        %v824 = vsel %vm820, %v804, %v807
        %v825 = vsel %vm823, %v813, 2102212464
        %v826 = vsel %vm822, %v810, %v825
        %v827 = vsel %vm821, %v824, %v826
        %v828 = vsel %vm820, %v807, %v810
        %v829 = vsel %vm823, %v816, 920167782
        %v830 = vsel %vm822, %v813, %v829
        %v831 = vsel %vm821, %v828, %v830
        %v832 = vsel %vm820, %v810, %v813
        %v833 = vsel %vm823, %v819, 1326507024
        %v834 = vsel %vm822, %v816, %v833
        %v835 = vsel %vm821, %v832, %v834
        %v836 = vshll.u32 %v796, 8
        %v837 = vmul.u32.u64.compose %v836, %v835
        %v838 = vextract.low.u32 %v837
        %v839 = vextract.high.u32 %v837
        %v840 = vmul.u32.u64.compose %v836, %v831
        %v841 = vextract.low.u32 %v840
        %v842 = vextract.high.u32 %v840
        %v843 = vmul.u32 %v836, %v827
        %v844 = vadd.s32 %v839, %v841
        %vm845 = vc.u32 %v839, %v841
        %v846 = vadd.s32 %v842, 1
        %v847 = vsel %vm845, %v846, %v842
        %v848 = vadd.s32 %v843, %v847
        %v849 = vadd.s32 %v848, 536870912
        %v850 = vshrl.u32 %v849, 30
        %v851 = vshll.u32 %v850, 30
        %v852 = vsub.s32 %v848, %v851
        %vm853 = vcmp.lt.s32.totalorder %v852, 0
        %v854 = vsub.s32 0, %v852
        %v855 = vsel %vm853, %v854, %v852
        %v856 = vclz %v855
        %v857 = vsub.s32 %v856, 2
        %vm858 = vcmp.gt.s32.totalorder 0, %v857
        %v859 = vsel %vm858, 0, %v857
        %v860 = vsub.s32 32, %v859
        %v861 = vshll.u32 %v852, %v859
        %v862 = vshrl.u32 %v844, %v860
        %v863 = vor.u32 %v861, %v862
        %v864 = vsub.s32 4294967266, %v859
        %v865 = vadd.s32 %v864, 127
        %v866 = vshll.u32 %v865, 23
        %v867 = vor.u32 4788187, %v866
        %v868 = vand.u32 2147483647, %v867
        %v870 = vcvt.s32.f32 %v863
        %v871 = vmul.f32 %v870, %v868
        %v872 = vxor.u32 %v871, 2147483648
        %v873 = vsel %vm790, %v872, %v871
        %v874 = vsub.s32 4, %v850
        %v875 = vsel %vm790, %v874, %v850
        %v876 = vsel %vm789, %v577, %v873
        %v877 = vsel %vm789, 0, %v875
        %v878 = vcosq.f32.pop %v876
        %v879 = vsinq.f32.pop %v876
        %vm880 = vweird.f32 %v577
        %v881 = vadd.s32 %v877, 3
        %v882 = vand.u32 %v881, 3
        %vm883 = vcmp.lt.s32.totalorder %v882, 2
        %vm884 = vcmp.eq.s32.totalorder %v882, 0
        %v885 = vxor.u32 %v879, 2147483648
        %v886 = vsel %vm884, %v878, %v885
        %vm887 = vcmp.eq.s32.totalorder %v882, 2
        %v888 = vxor.u32 %v878, 2147483648
        %v889 = vsel %vm887, %v888, %v879
        %v890 = vsel %vm883, %v886, %v889
        %v891 = vsel %vm880, nan, %v890
        %v892 = vand.u32 2147483647, %v578
        %vm893 = vcmp.le.f32.partialorder %v892, 0.7853982
        %vm894 = vcmp.lt.s32.totalorder %v578, 0
        %v895 = vand.u32 %v578, 2139095040
        %v896 = vshrl.u32 %v895, 23
        %v897 = vsub.s32 %v896, 127
        %v898 = vand.u32 2147483647, %v578
        %v899 = vand.u32 %v898, 8388607
        %v900 = vor.u32 %v899, 8388608
        %v901 = vsub.s32 0, %v900
        %v902 = vadd.s32 %v897, 1
        %vm903 = vcmp.gt.s32.totalorder %v902, 0
        %v904 = vsel %vm903, %v902, 0
        %v905 = vshrl.u32 %v904, 5
        %v906 = vand.u32 %v904, 31
        %v907 = vsub.s32 32, %v906
        %v908 = vshrl.u32 683565275, %v907
        %v909 = vshll.u32 683565275, %v906
        %v910 = vshrl.u32 2475754826, %v907
        %v911 = vor.u32 %v909, %v910
        %v912 = vshll.u32 2475754826, %v906
        %v913 = vshrl.u32 2131351028, %v907
        %v914 = vor.u32 %v912, %v913
        %v915 = vshll.u32 2131351028, %v906
        %v916 = vshrl.u32 2102212464, %v907
        %v917 = vor.u32 %v915, %v916
        %v918 = vshll.u32 2102212464, %v906
        %v919 = vshrl.u32 920167782, %v907
        %v920 = vor.u32 %v918, %v919
        %v921 = vshll.u32 920167782, %v906
        %v922 = vshrl.u32 1326507024, %v907
        %v923 = vor.u32 %v921, %v922
        %vm924 = vcmp.lt.s32.totalorder %v905, 1
        %vm925 = vcmp.lt.s32.totalorder %v905, 2
        %vm926 = vcmp.lt.s32.totalorder %v905, 3
        %vm927 = vcmp.lt.s32.totalorder %v905, 4
        %v928 = vsel %vm924, %v908, %v911
        %v929 = vsel %vm927, %v917, 2102212464
        %v930 = vsel %vm926, %v914, %v929
        %v931 = vsel %vm925, %v928, %v930
        %v932 = vsel %vm924, %v911, %v914
        %v933 = vsel %vm927, %v920, 920167782
        %v934 = vsel %vm926, %v917, %v933
        %v935 = vsel %vm925, %v932, %v934
        %v936 = vsel %vm924, %v914, %v917
        %v937 = vsel %vm927, %v923, 1326507024
        %v938 = vsel %vm926, %v920, %v937
        %v939 = vsel %vm925, %v936, %v938
        %v940 = vshll.u32 %v900, 8
        %v941 = vmul.u32.u64.compose %v940, %v939
        %v942 = vextract.low.u32 %v941
        %v943 = vextract.high.u32 %v941
        %v944 = vmul.u32.u64.compose %v940, %v935
        %v945 = vextract.low.u32 %v944
        %v946 = vextract.high.u32 %v944
        %v947 = vmul.u32 %v940, %v931
        %v948 = vadd.s32 %v943, %v945
        %vm949 = vc.u32 %v943, %v945
        %v950 = vadd.s32 %v946, 1
        %v951 = vsel %vm949, %v950, %v946
        %v952 = vadd.s32 %v947, %v951
        %v953 = vadd.s32 %v952, 536870912
        %v954 = vshrl.u32 %v953, 30
        %v955 = vshll.u32 %v954, 30
        %v956 = vsub.s32 %v952, %v955
        %vm957 = vcmp.lt.s32.totalorder %v956, 0
        %v958 = vsub.s32 0, %v956
        %v959 = vsel %vm957, %v958, %v956
        %v960 = vclz %v959
        %v961 = vsub.s32 %v960, 2
        %vm962 = vcmp.gt.s32.totalorder 0, %v961
        %v963 = vsel %vm962, 0, %v961
        %v964 = vsub.s32 32, %v963
        %v965 = vshll.u32 %v956, %v963
        %v966 = vshrl.u32 %v948, %v964
        %v967 = vor.u32 %v965, %v966
        %v968 = vsub.s32 4294967266, %v963
        %v969 = vadd.s32 %v968, 127
        %v970 = vshll.u32 %v969, 23
        %v971 = vor.u32 4788187, %v970
        %v972 = vand.u32 2147483647, %v971
        %v974 = vcvt.s32.f32 %v967
        %v975 = vmul.f32 %v974, %v972
        %v976 = vxor.u32 %v975, 2147483648
        %v977 = vsel %vm894, %v976, %v975
        %v978 = vsub.s32 4, %v954
        %v979 = vsel %vm894, %v978, %v954
        %v980 = vsel %vm893, %v578, %v977
        %v981 = vsel %vm893, 0, %v979
        %v982 = vcosq.f32.pop %v980
        %v983 = vsinq.f32.pop %v980
        %vm984 = vweird.f32 %v578
        %v985 = vadd.s32 %v981, 3
        %v986 = vand.u32 %v985, 3
        %vm987 = vcmp.lt.s32.totalorder %v986, 2
        %vm988 = vcmp.eq.s32.totalorder %v986, 0
        %v989 = vxor.u32 %v983, 2147483648
        %v990 = vsel %vm988, %v982, %v989
        %vm991 = vcmp.eq.s32.totalorder %v986, 2
        %v992 = vxor.u32 %v982, 2147483648
        %v993 = vsel %vm991, %v992, %v983
        %v994 = vsel %vm987, %v990, %v993
        %v995 = vsel %vm984, nan, %v994
        %v996 = vand.u32 2147483647, %v579
        %vm997 = vcmp.le.f32.partialorder %v996, 0.7853982
        %vm998 = vcmp.lt.s32.totalorder %v579, 0
        %v999 = vand.u32 %v579, 2139095040
        %v1000 = vshrl.u32 %v999, 23
        %v1001 = vsub.s32 %v1000, 127
        %v1002 = vand.u32 2147483647, %v579
        %v1003 = vand.u32 %v1002, 8388607
        %v1004 = vor.u32 %v1003, 8388608
        %v1005 = vsub.s32 0, %v1004
        %v1006 = vadd.s32 %v1001, 1
        %vm1007 = vcmp.gt.s32.totalorder %v1006, 0
        %v1008 = vsel %vm1007, %v1006, 0
        %v1009 = vshrl.u32 %v1008, 5
        %v1010 = vand.u32 %v1008, 31
        %v1011 = vsub.s32 32, %v1010
        %v1012 = vshrl.u32 683565275, %v1011
        %v1013 = vshll.u32 683565275, %v1010
        %v1014 = vshrl.u32 2475754826, %v1011
        %v1015 = vor.u32 %v1013, %v1014
        %v1016 = vshll.u32 2475754826, %v1010
        %v1017 = vshrl.u32 2131351028, %v1011
        %v1018 = vor.u32 %v1016, %v1017
        %v1019 = vshll.u32 2131351028, %v1010
        %v1020 = vshrl.u32 2102212464, %v1011
        %v1021 = vor.u32 %v1019, %v1020
        %v1022 = vshll.u32 2102212464, %v1010
        %v1023 = vshrl.u32 920167782, %v1011
        %v1024 = vor.u32 %v1022, %v1023
        %v1025 = vshll.u32 920167782, %v1010
        %v1026 = vshrl.u32 1326507024, %v1011
        %v1027 = vor.u32 %v1025, %v1026
        %vm1028 = vcmp.lt.s32.totalorder %v1009, 1
        %vm1029 = vcmp.lt.s32.totalorder %v1009, 2
        %vm1030 = vcmp.lt.s32.totalorder %v1009, 3
        %vm1031 = vcmp.lt.s32.totalorder %v1009, 4
        %v1032 = vsel %vm1028, %v1012, %v1015
        %v1033 = vsel %vm1031, %v1021, 2102212464
        %v1034 = vsel %vm1030, %v1018, %v1033
        %v1035 = vsel %vm1029, %v1032, %v1034
        %v1036 = vsel %vm1028, %v1015, %v1018
        %v1037 = vsel %vm1031, %v1024, 920167782
        %v1038 = vsel %vm1030, %v1021, %v1037
        %v1039 = vsel %vm1029, %v1036, %v1038
        %v1040 = vsel %vm1028, %v1018, %v1021
        %v1041 = vsel %vm1031, %v1027, 1326507024
        %v1042 = vsel %vm1030, %v1024, %v1041
        %v1043 = vsel %vm1029, %v1040, %v1042
        %v1044 = vshll.u32 %v1004, 8
        %v1045 = vmul.u32.u64.compose %v1044, %v1043
        %v1046 = vextract.low.u32 %v1045
        %v1047 = vextract.high.u32 %v1045
        %v1048 = vmul.u32.u64.compose %v1044, %v1039
        %v1049 = vextract.low.u32 %v1048
        %v1050 = vextract.high.u32 %v1048
        %v1051 = vmul.u32 %v1044, %v1035
        %v1052 = vadd.s32 %v1047, %v1049
        %vm1053 = vc.u32 %v1047, %v1049
        %v1054 = vadd.s32 %v1050, 1
        %v1055 = vsel %vm1053, %v1054, %v1050
        %v1056 = vadd.s32 %v1051, %v1055
        %v1057 = vadd.s32 %v1056, 536870912
        %v1058 = vshrl.u32 %v1057, 30
        %v1059 = vshll.u32 %v1058, 30
        %v1060 = vsub.s32 %v1056, %v1059
        %vm1061 = vcmp.lt.s32.totalorder %v1060, 0
        %v1062 = vsub.s32 0, %v1060
        %v1063 = vsel %vm1061, %v1062, %v1060
        %v1064 = vclz %v1063
        %v1065 = vsub.s32 %v1064, 2
        %vm1066 = vcmp.gt.s32.totalorder 0, %v1065
        %v1067 = vsel %vm1066, 0, %v1065
        %v1068 = vsub.s32 32, %v1067
        %v1069 = vshll.u32 %v1060, %v1067
        %v1070 = vshrl.u32 %v1052, %v1068
        %v1071 = vor.u32 %v1069, %v1070
        %v1072 = vsub.s32 4294967266, %v1067
        %v1073 = vadd.s32 %v1072, 127
        %v1074 = vshll.u32 %v1073, 23
        %v1075 = vor.u32 4788187, %v1074
        %v1076 = vand.u32 2147483647, %v1075
        %v1078 = vcvt.s32.f32 %v1071
        %v1079 = vmul.f32 %v1078, %v1076
        %v1080 = vxor.u32 %v1079, 2147483648
        %v1081 = vsel %vm998, %v1080, %v1079
        %v1082 = vsub.s32 4, %v1058
        %v1083 = vsel %vm998, %v1082, %v1058
        %v1084 = vsel %vm997, %v579, %v1081
        %v1085 = vsel %vm997, 0, %v1083
        %v1086 = vcosq.f32.pop %v1084
        %v1087 = vsinq.f32.pop %v1084
        %vm1088 = vweird.f32 %v579
        %v1089 = vadd.s32 %v1085, 3
        %v1090 = vand.u32 %v1089, 3
        %vm1091 = vcmp.lt.s32.totalorder %v1090, 2
        %vm1092 = vcmp.eq.s32.totalorder %v1090, 0
        %v1093 = vxor.u32 %v1087, 2147483648
        %v1094 = vsel %vm1092, %v1086, %v1093
        %vm1095 = vcmp.eq.s32.totalorder %v1090, 2
        %v1096 = vxor.u32 %v1086, 2147483648
        %v1097 = vsel %vm1095, %v1096, %v1087
        %v1098 = vsel %vm1091, %v1094, %v1097
        %v1099 = vsel %vm1088, nan, %v1098
        %v1100 = vld [vmem:[%s3] sm:$0xff]
        %v1101 = vld [vmem:[%s3 + $0x8] sm:$0xff]
        %v1102 = vld [vmem:[%s3 + $0x10] sm:$0xff]
        %v1103 = vld [vmem:[%s3 + $0x18] sm:$0xff]
        %v1104 = vld [vmem:[%s3 + $0x20] sm:$0xff]
        %v1105 = vld [vmem:[%s4] sm:$0xff]
        %v1106 = vld [vmem:[%s4 + $0x8] sm:$0xff]
        %v1107 = vld [vmem:[%s4 + $0x10] sm:$0xff]
        %v1108 = vld [vmem:[%s4 + $0x18] sm:$0xff]
        %v1109 = vld [vmem:[%s4 + $0x20] sm:$0xff]
        %1111 = vset.pattern.permute.xlu0 0
        %1112 = vperm.xlu0 %1111, %v1105
        %v1113 = vpop.permute.xlu0 %1112
        %1116 = vset.pattern.permute.xlu0 0
        %1117 = vperm.xlu0 %1116, %v1106
        %v1118 = vpop.permute.xlu0 %1117
        %1121 = vset.pattern.permute.xlu0 0
        %1122 = vperm.xlu0 %1121, %v1107
        %v1123 = vpop.permute.xlu0 %1122
        %1126 = vset.pattern.permute.xlu0 0
        %1127 = vperm.xlu0 %1126, %v1108
        %v1128 = vpop.permute.xlu0 %1127
        %1131 = vset.pattern.permute.xlu0 0
        %1132 = vperm.xlu0 %1131, %v1109
        %v1133 = vpop.permute.xlu0 %1132
        %vm1135 = vcmask 162816
        %v1137 = vsel %vm1135, %v1100, 0
        %v1140 = vsel %vm1135, %v1101, 0
        %v1143 = vsel %vm1135, %v1102, 0
        %v1146 = vsel %vm1135, %v1103, 0
        %v1149 = vsel %vm1135, %v1104, 0
        %vm1151 = vcmask 1043456
        %v1153 = vsel %vm1151, %v891, 0
        %1155 = vmatprep.subr.mxu0 0.0
        %1156 = vmatpush1.msra.mxu0 %v683
        %1157 = vmatprep.subr.mxu0 0.0
        %1158 = vmatpush1.msra.mxu0 %v787
        %1159 = vmatprep.subr.mxu0 0.0
        %1160 = vmatpush1.msra.mxu0 %v1153
        %1161 = vmatprep.subr.mxu0 0.0
        %1162 = vmatpush1.msra.mxu0 0.0
        %1163 = vmatprep.subr.mxu0 0.0
        %1164 = vmatpush1.msra.mxu0 0.0
        %1165 = vmatprep.subr.mxu0 0.0
        %1166 = vmatpush1.msra.mxu0 0.0
        %1167 = vmatprep.subr.mxu0 0.0
        %1168 = vmatpush1.msra.mxu0 0.0
        %1169 = vmatprep.subr.mxu0 0.0
        %1170 = vmatpush1.msra.mxu0 0.0
        %1171 = vmatprep.subr.mxu0 0.0
        %1172 = vmatpush1.msra.mxu0 0.0
        %1173 = vmatprep.subr.mxu0 0.0
        %1174 = vmatpush1.msra.mxu0 0.0
        %1175 = vmatprep.subr.mxu0 0.0
        %1176 = vmatpush1.msra.mxu0 0.0
        %1177 = vmatprep.subr.mxu0 0.0
        %1178 = vmatpush1.msra.mxu0 0.0
        %1179 = vmatprep.subr.mxu0 0.0
        %1180 = vmatpush1.msra.mxu0 0.0
        %1181 = vmatprep.subr.mxu0 0.0
        %1182 = vmatpush1.msra.mxu0 0.0
        %1183 = vmatprep.subr.mxu0 0.0
        %1184 = vmatpush1.msra.mxu0 0.0
        %1185 = vmatprep.subr.mxu0 0.0
        %1186 = vmatpush1.msra.mxu0 0.0
        %1187 = vmatprep.subr.mxu0 0.0
        %1188 = vmatpush1.msra.mxu0 0.0
        %1189 = vmatprep.subr.mxu0 0.0
        %1190 = vmatpush1.msra.mxu0 0.0
        %1191 = vmatprep.subr.mxu0 0.0
        %1192 = vmatpush1.msra.mxu0 0.0
        %1193 = vmatprep.subr.mxu0 0.0
        %1194 = vmatpush1.msra.mxu0 0.0
        %1195 = vmatprep.subr.mxu0 0.0
        %1196 = vmatpush1.msra.mxu0 0.0
        %1197 = vmatprep.subr.mxu0 0.0
        %1198 = vmatpush1.msra.mxu0 0.0
        %1199 = vmatprep.subr.mxu0 0.0
        %1200 = vmatpush1.msra.mxu0 0.0
        %1201 = vmatprep.subr.mxu0 0.0
        %1202 = vmatpush1.msra.mxu0 0.0
        %1203 = vmatprep.subr.mxu0 0.0
        %1204 = vmatpush1.msra.mxu0 0.0
        %1205 = vmatprep.subr.mxu0 0.0
        %1206 = vmatpush1.msra.mxu0 0.0
        %1207 = vmatprep.subr.mxu0 0.0
        %1208 = vmatpush1.msra.mxu0 0.0
        %1209 = vmatprep.subr.mxu0 0.0
        %1210 = vmatpush1.msra.mxu0 0.0
        %1211 = vmatprep.subr.mxu0 0.0
        %1212 = vmatpush1.msra.mxu0 0.0
        %1213 = vmatprep.subr.mxu0 0.0
        %1214 = vmatpush1.msra.mxu0 0.0
        %1215 = vmatprep.subr.mxu0 0.0
        %1216 = vmatpush1.msra.mxu0 0.0
        %1217 = vmatprep.subr.mxu0 0.0
        %1218 = vmatpush1.msra.mxu0 0.0
        %1219 = vmatprep.mubr.f32.mxu0 0.0
        %1220 = vmatmul.mubr.f32.gmra.mrb[0].mxu0 %v1137
        %v1221 = vpop.f32.mrb[0].mxu0
        %v1222 = vadd.f32 %v1113, %v1221
        %v1223 = vpop.f32.mrb[0].mxu0
        %1224 = vmatprep.mubr.f32.mxu0 0.0
        %1225 = vmatmul.mubr.f32.gmra.mrb[0].mxu0 %v1140
        %v1226 = vpop.f32.mrb[0].mxu0
        %v1227 = vadd.f32 %v1118, %v1226
        %v1228 = vpop.f32.mrb[0].mxu0
        %1229 = vmatprep.mubr.f32.mxu0 0.0
        %1230 = vmatmul.mubr.f32.gmra.mrb[0].mxu0 %v1143
        %v1231 = vpop.f32.mrb[0].mxu0
        %v1232 = vadd.f32 %v1123, %v1231
        %v1233 = vpop.f32.mrb[0].mxu0
        %1234 = vmatprep.mubr.f32.mxu0 0.0
        %1235 = vmatmul.mubr.f32.gmra.mrb[0].mxu0 %v1146
        %v1236 = vpop.f32.mrb[0].mxu0
        %v1237 = vadd.f32 %v1128, %v1236
        %v1238 = vpop.f32.mrb[0].mxu0
        %1239 = vmatprep.mubr.f32.mxu0 0.0
        %1240 = vmatmul.mubr.f32.gmra.mrb[0].mxu0 %v1149
        %v1241 = vpop.f32.mrb[0].mxu0
        %v1242 = vadd.f32 %v1133, %v1241
        %v1243 = vpop.f32.mrb[0].mxu0
        %1244 = vdwg.mxu0
        %v1245 = vld [vmem:[%s5] sm:$0xff]
        %v1246 = vld [vmem:[%s5 + $0x8] sm:$0xff]
        %v1247 = vld [vmem:[%s5 + $0x10] sm:$0xf]
        %v1248 = vld [vmem:[%s6] sm:$0xff]
        %v1249 = vld [vmem:[%s6 + $0x8] sm:$0xff]
        %v1250 = vld [vmem:[%s6 + $0x10] sm:$0xf]
        %1252 = vset.pattern.permute.xlu0 0
        %1253 = vperm.xlu0 %1252, %v1248
        %v1254 = vpop.permute.xlu0 %1253
        %1257 = vset.pattern.permute.xlu0 0
        %1258 = vperm.xlu0 %1257, %v1249
        %v1259 = vpop.permute.xlu0 %1258
        %1262 = vset.pattern.permute.xlu0 0
        %1263 = vperm.xlu0 %1262, %v1250
        %v1264 = vpop.permute.xlu0 %1263
        %v1268 = vrot.slane %v891, 4
        %v1269 = vrot.slane %v995, 4
        %v1270 = vsel %vm1151, %v1268, %v1269
        %v1271 = vrot.slane %v1099, 4
        %v1272 = vsel %vm1151, %v1269, %v1271
        %v1276 = vsel %vm1135, %v1245, 0
        %v1279 = vsel %vm1135, %v1246, 0
        %v1282 = vsel %vm1135, %v1247, 0
        %v1284 = vsel %vm1151, %v1271, 0
        %1286 = vmatprep.subr.mxu0 0.0
        %1287 = vmatpush1.msra.mxu0 %v1270
        %1288 = vmatprep.subr.mxu0 0.0
        %1289 = vmatpush1.msra.mxu0 %v1272
        %1290 = vmatprep.subr.mxu0 0.0
        %1291 = vmatpush1.msra.mxu0 %v1284
        %1292 = vmatprep.subr.mxu0 0.0
        %1293 = vmatpush1.msra.mxu0 0.0
        %1294 = vmatprep.subr.mxu0 0.0
        %1295 = vmatpush1.msra.mxu0 0.0
        %1296 = vmatprep.subr.mxu0 0.0
        %1297 = vmatpush1.msra.mxu0 0.0
        %1298 = vmatprep.subr.mxu0 0.0
        %1299 = vmatpush1.msra.mxu0 0.0
        %1300 = vmatprep.subr.mxu0 0.0
        %1301 = vmatpush1.msra.mxu0 0.0
        %1302 = vmatprep.subr.mxu0 0.0
        %1303 = vmatpush1.msra.mxu0 0.0
        %1304 = vmatprep.subr.mxu0 0.0
        %1305 = vmatpush1.msra.mxu0 0.0
        %1306 = vmatprep.subr.mxu0 0.0
        %1307 = vmatpush1.msra.mxu0 0.0
        %1308 = vmatprep.subr.mxu0 0.0
        %1309 = vmatpush1.msra.mxu0 0.0
        %1310 = vmatprep.subr.mxu0 0.0
        %1311 = vmatpush1.msra.mxu0 0.0
        %1312 = vmatprep.subr.mxu0 0.0
        %1313 = vmatpush1.msra.mxu0 0.0
        %1314 = vmatprep.subr.mxu0 0.0
        %1315 = vmatpush1.msra.mxu0 0.0
        %1316 = vmatprep.subr.mxu0 0.0
        %1317 = vmatpush1.msra.mxu0 0.0
        %1318 = vmatprep.subr.mxu0 0.0
        %1319 = vmatpush1.msra.mxu0 0.0
        %1320 = vmatprep.subr.mxu0 0.0
        %1321 = vmatpush1.msra.mxu0 0.0
        %1322 = vmatprep.subr.mxu0 0.0
        %1323 = vmatpush1.msra.mxu0 0.0
        %1324 = vmatprep.subr.mxu0 0.0
        %1325 = vmatpush1.msra.mxu0 0.0
        %1326 = vmatprep.subr.mxu0 0.0
        %1327 = vmatpush1.msra.mxu0 0.0
        %1328 = vmatprep.subr.mxu0 0.0
        %1329 = vmatpush1.msra.mxu0 0.0
        %1330 = vmatprep.subr.mxu0 0.0
        %1331 = vmatpush1.msra.mxu0 0.0
        %1332 = vmatprep.subr.mxu0 0.0
        %1333 = vmatpush1.msra.mxu0 0.0
        %1334 = vmatprep.subr.mxu0 0.0
        %1335 = vmatpush1.msra.mxu0 0.0
        %1336 = vmatprep.subr.mxu0 0.0
        %1337 = vmatpush1.msra.mxu0 0.0
        %1338 = vmatprep.subr.mxu0 0.0
        %1339 = vmatpush1.msra.mxu0 0.0
        %1340 = vmatprep.subr.mxu0 0.0
        %1341 = vmatpush1.msra.mxu0 0.0
        %1342 = vmatprep.subr.mxu0 0.0
        %1343 = vmatpush1.msra.mxu0 0.0
        %1344 = vmatprep.subr.mxu0 0.0
        %1345 = vmatpush1.msra.mxu0 0.0
        %1346 = vmatprep.subr.mxu0 0.0
        %1347 = vmatpush1.msra.mxu0 0.0
        %1348 = vmatprep.subr.mxu0 0.0
        %1349 = vmatpush1.msra.mxu0 0.0
        %1350 = vmatprep.mubr.f32.mxu0 0.0
        %1351 = vmatmul.mubr.f32.gmra.mrb[0].mxu0 %v1276
        %v1352 = vpop.f32.mrb[0].mxu0
        %v1353 = vadd.f32 %v1254, %v1352
        %v1354 = vpop.f32.mrb[0].mxu0
        %1355 = vmatprep.mubr.f32.mxu0 0.0
        %1356 = vmatmul.mubr.f32.gmra.mrb[0].mxu0 %v1279
        %v1357 = vpop.f32.mrb[0].mxu0
        %v1358 = vadd.f32 %v1259, %v1357
        %v1359 = vpop.f32.mrb[0].mxu0
        %1360 = vmatprep.mubr.f32.mxu0 0.0
        %1361 = vmatmul.mubr.f32.gmra.mrb[0].mxu0 %v1282
        %v1362 = vpop.f32.mrb[0].mxu0
        %v1363 = vadd.f32 %v1264, %v1362
        %v1364 = vpop.f32.mrb[0].mxu0
        %1365 = vdwg.mxu0
        %v1366 = vand.u32 2147483647, %v1353
        %vm1367 = vcmp.le.f32.partialorder %v1366, 0.7853982
        %vm1368 = vcmp.lt.s32.totalorder %v1353, 0
        %v1369 = vand.u32 %v1353, 2139095040
        %v1370 = vshrl.u32 %v1369, 23
        %v1371 = vsub.s32 %v1370, 127
        %v1372 = vand.u32 2147483647, %v1353
        %v1373 = vand.u32 %v1372, 8388607
        %v1374 = vor.u32 %v1373, 8388608
        %v1375 = vsub.s32 0, %v1374
        %v1376 = vadd.s32 %v1371, 1
        %vm1377 = vcmp.gt.s32.totalorder %v1376, 0
        %v1378 = vsel %vm1377, %v1376, 0
        %v1379 = vshrl.u32 %v1378, 5
        %v1380 = vand.u32 %v1378, 31
        %v1381 = vsub.s32 32, %v1380
        %v1382 = vshrl.u32 683565275, %v1381
        %v1383 = vshll.u32 683565275, %v1380
        %v1384 = vshrl.u32 2475754826, %v1381
        %v1385 = vor.u32 %v1383, %v1384
        %v1386 = vshll.u32 2475754826, %v1380
        %v1387 = vshrl.u32 2131351028, %v1381
        %v1388 = vor.u32 %v1386, %v1387
        %v1389 = vshll.u32 2131351028, %v1380
        %v1390 = vshrl.u32 2102212464, %v1381
        %v1391 = vor.u32 %v1389, %v1390
        %v1392 = vshll.u32 2102212464, %v1380
        %v1393 = vshrl.u32 920167782, %v1381
        %v1394 = vor.u32 %v1392, %v1393
        %v1395 = vshll.u32 920167782, %v1380
        %v1396 = vshrl.u32 1326507024, %v1381
        %v1397 = vor.u32 %v1395, %v1396
        %vm1398 = vcmp.lt.s32.totalorder %v1379, 1
        %vm1399 = vcmp.lt.s32.totalorder %v1379, 2
        %vm1400 = vcmp.lt.s32.totalorder %v1379, 3
        %vm1401 = vcmp.lt.s32.totalorder %v1379, 4
        %v1402 = vsel %vm1398, %v1382, %v1385
        %v1403 = vsel %vm1401, %v1391, 2102212464
        %v1404 = vsel %vm1400, %v1388, %v1403
        %v1405 = vsel %vm1399, %v1402, %v1404
        %v1406 = vsel %vm1398, %v1385, %v1388
        %v1407 = vsel %vm1401, %v1394, 920167782
        %v1408 = vsel %vm1400, %v1391, %v1407
        %v1409 = vsel %vm1399, %v1406, %v1408
        %v1410 = vsel %vm1398, %v1388, %v1391
        %v1411 = vsel %vm1401, %v1397, 1326507024
        %v1412 = vsel %vm1400, %v1394, %v1411
        %v1413 = vsel %vm1399, %v1410, %v1412
        %v1414 = vshll.u32 %v1374, 8
        %v1415 = vmul.u32.u64.compose %v1414, %v1413
        %v1416 = vextract.low.u32 %v1415
        %v1417 = vextract.high.u32 %v1415
        %v1418 = vmul.u32.u64.compose %v1414, %v1409
        %v1419 = vextract.low.u32 %v1418
        %v1420 = vextract.high.u32 %v1418
        %v1421 = vmul.u32 %v1414, %v1405
        %v1422 = vadd.s32 %v1417, %v1419
        %vm1423 = vc.u32 %v1417, %v1419
        %v1424 = vadd.s32 %v1420, 1
        %v1425 = vsel %vm1423, %v1424, %v1420
        %v1426 = vadd.s32 %v1421, %v1425
        %v1427 = vadd.s32 %v1426, 536870912
        %v1428 = vshrl.u32 %v1427, 30
        %v1429 = vshll.u32 %v1428, 30
        %v1430 = vsub.s32 %v1426, %v1429
        %vm1431 = vcmp.lt.s32.totalorder %v1430, 0
        %v1432 = vsub.s32 0, %v1430
        %v1433 = vsel %vm1431, %v1432, %v1430
        %v1434 = vclz %v1433
        %v1435 = vsub.s32 %v1434, 2
        %vm1436 = vcmp.gt.s32.totalorder 0, %v1435
        %v1437 = vsel %vm1436, 0, %v1435
        %v1438 = vsub.s32 32, %v1437
        %v1439 = vshll.u32 %v1430, %v1437
        %v1440 = vshrl.u32 %v1422, %v1438
        %v1441 = vor.u32 %v1439, %v1440
        %v1442 = vsub.s32 4294967266, %v1437
        %v1443 = vadd.s32 %v1442, 127
        %v1444 = vshll.u32 %v1443, 23
        %v1445 = vor.u32 4788187, %v1444
        %v1446 = vand.u32 2147483647, %v1445
        %v1448 = vcvt.s32.f32 %v1441
        %v1449 = vmul.f32 %v1448, %v1446
        %v1450 = vxor.u32 %v1449, 2147483648
        %v1451 = vsel %vm1368, %v1450, %v1449
        %v1452 = vsub.s32 4, %v1428
        %v1453 = vsel %vm1368, %v1452, %v1428
        %v1454 = vsel %vm1367, %v1353, %v1451
        %v1455 = vsel %vm1367, 0, %v1453
        %v1456 = vcosq.f32.pop %v1454
        %v1457 = vsinq.f32.pop %v1454
        %vm1458 = vweird.f32 %v1353
        %v1459 = vadd.s32 %v1455, 3
        %v1460 = vand.u32 %v1459, 3
        %vm1461 = vcmp.lt.s32.totalorder %v1460, 2
        %vm1462 = vcmp.eq.s32.totalorder %v1460, 0
        %v1463 = vxor.u32 %v1457, 2147483648
        %v1464 = vsel %vm1462, %v1456, %v1463
        %vm1465 = vcmp.eq.s32.totalorder %v1460, 2
        %v1466 = vxor.u32 %v1456, 2147483648
        %v1467 = vsel %vm1465, %v1466, %v1457
        %v1468 = vsel %vm1461, %v1464, %v1467
        %v1469 = vsel %vm1458, nan, %v1468
        %v1470 = vand.u32 2147483647, %v1358
        %vm1471 = vcmp.le.f32.partialorder %v1470, 0.7853982
        %vm1472 = vcmp.lt.s32.totalorder %v1358, 0
        %v1473 = vand.u32 %v1358, 2139095040
        %v1474 = vshrl.u32 %v1473, 23
        %v1475 = vsub.s32 %v1474, 127
        %v1476 = vand.u32 2147483647, %v1358
        %v1477 = vand.u32 %v1476, 8388607
        %v1478 = vor.u32 %v1477, 8388608
        %v1479 = vsub.s32 0, %v1478
        %v1480 = vadd.s32 %v1475, 1
        %vm1481 = vcmp.gt.s32.totalorder %v1480, 0
        %v1482 = vsel %vm1481, %v1480, 0
        %v1483 = vshrl.u32 %v1482, 5
        %v1484 = vand.u32 %v1482, 31
        %v1485 = vsub.s32 32, %v1484
        %v1486 = vshrl.u32 683565275, %v1485
        %v1487 = vshll.u32 683565275, %v1484
        %v1488 = vshrl.u32 2475754826, %v1485
        %v1489 = vor.u32 %v1487, %v1488
        %v1490 = vshll.u32 2475754826, %v1484
        %v1491 = vshrl.u32 2131351028, %v1485
        %v1492 = vor.u32 %v1490, %v1491
        %v1493 = vshll.u32 2131351028, %v1484
        %v1494 = vshrl.u32 2102212464, %v1485
        %v1495 = vor.u32 %v1493, %v1494
        %v1496 = vshll.u32 2102212464, %v1484
        %v1497 = vshrl.u32 920167782, %v1485
        %v1498 = vor.u32 %v1496, %v1497
        %v1499 = vshll.u32 920167782, %v1484
        %v1500 = vshrl.u32 1326507024, %v1485
        %v1501 = vor.u32 %v1499, %v1500
        %vm1502 = vcmp.lt.s32.totalorder %v1483, 1
        %vm1503 = vcmp.lt.s32.totalorder %v1483, 2
        %vm1504 = vcmp.lt.s32.totalorder %v1483, 3
        %vm1505 = vcmp.lt.s32.totalorder %v1483, 4
        %v1506 = vsel %vm1502, %v1486, %v1489
        %v1507 = vsel %vm1505, %v1495, 2102212464
        %v1508 = vsel %vm1504, %v1492, %v1507
        %v1509 = vsel %vm1503, %v1506, %v1508
        %v1510 = vsel %vm1502, %v1489, %v1492
        %v1511 = vsel %vm1505, %v1498, 920167782
        %v1512 = vsel %vm1504, %v1495, %v1511
        %v1513 = vsel %vm1503, %v1510, %v1512
        %v1514 = vsel %vm1502, %v1492, %v1495
        %v1515 = vsel %vm1505, %v1501, 1326507024
        %v1516 = vsel %vm1504, %v1498, %v1515
        %v1517 = vsel %vm1503, %v1514, %v1516
        %v1518 = vshll.u32 %v1478, 8
        %v1519 = vmul.u32.u64.compose %v1518, %v1517
        %v1520 = vextract.low.u32 %v1519
        %v1521 = vextract.high.u32 %v1519
        %v1522 = vmul.u32.u64.compose %v1518, %v1513
        %v1523 = vextract.low.u32 %v1522
        %v1524 = vextract.high.u32 %v1522
        %v1525 = vmul.u32 %v1518, %v1509
        %v1526 = vadd.s32 %v1521, %v1523
        %vm1527 = vc.u32 %v1521, %v1523
        %v1528 = vadd.s32 %v1524, 1
        %v1529 = vsel %vm1527, %v1528, %v1524
        %v1530 = vadd.s32 %v1525, %v1529
        %v1531 = vadd.s32 %v1530, 536870912
        %v1532 = vshrl.u32 %v1531, 30
        %v1533 = vshll.u32 %v1532, 30
        %v1534 = vsub.s32 %v1530, %v1533
        %vm1535 = vcmp.lt.s32.totalorder %v1534, 0
        %v1536 = vsub.s32 0, %v1534
        %v1537 = vsel %vm1535, %v1536, %v1534
        %v1538 = vclz %v1537
        %v1539 = vsub.s32 %v1538, 2
        %vm1540 = vcmp.gt.s32.totalorder 0, %v1539
        %v1541 = vsel %vm1540, 0, %v1539
        %v1542 = vsub.s32 32, %v1541
        %v1543 = vshll.u32 %v1534, %v1541
        %v1544 = vshrl.u32 %v1526, %v1542
        %v1545 = vor.u32 %v1543, %v1544
        %v1546 = vsub.s32 4294967266, %v1541
        %v1547 = vadd.s32 %v1546, 127
        %v1548 = vshll.u32 %v1547, 23
        %v1549 = vor.u32 4788187, %v1548
        %v1550 = vand.u32 2147483647, %v1549
        %v1552 = vcvt.s32.f32 %v1545
        %v1553 = vmul.f32 %v1552, %v1550
        %v1554 = vxor.u32 %v1553, 2147483648
        %v1555 = vsel %vm1472, %v1554, %v1553
        %v1556 = vsub.s32 4, %v1532
        %v1557 = vsel %vm1472, %v1556, %v1532
        %v1558 = vsel %vm1471, %v1358, %v1555
        %v1559 = vsel %vm1471, 0, %v1557
        %v1560 = vcosq.f32.pop %v1558
        %v1561 = vsinq.f32.pop %v1558
        %vm1562 = vweird.f32 %v1358
        %v1563 = vadd.s32 %v1559, 3
        %v1564 = vand.u32 %v1563, 3
        %vm1565 = vcmp.lt.s32.totalorder %v1564, 2
        %vm1566 = vcmp.eq.s32.totalorder %v1564, 0
        %v1567 = vxor.u32 %v1561, 2147483648
        %v1568 = vsel %vm1566, %v1560, %v1567
        %vm1569 = vcmp.eq.s32.totalorder %v1564, 2
        %v1570 = vxor.u32 %v1560, 2147483648
        %v1571 = vsel %vm1569, %v1570, %v1561
        %v1572 = vsel %vm1565, %v1568, %v1571
        %v1573 = vsel %vm1562, nan, %v1572
        %v1574 = vand.u32 2147483647, %v1363
        %vm1575 = vcmp.le.f32.partialorder %v1574, 0.7853982
        %vm1576 = vcmp.lt.s32.totalorder %v1363, 0
        %v1577 = vand.u32 %v1363, 2139095040
        %v1578 = vshrl.u32 %v1577, 23
        %v1579 = vsub.s32 %v1578, 127
        %v1580 = vand.u32 2147483647, %v1363
        %v1581 = vand.u32 %v1580, 8388607
        %v1582 = vor.u32 %v1581, 8388608
        %v1583 = vsub.s32 0, %v1582
        %v1584 = vadd.s32 %v1579, 1
        %vm1585 = vcmp.gt.s32.totalorder %v1584, 0
        %v1586 = vsel %vm1585, %v1584, 0
        %v1587 = vshrl.u32 %v1586, 5
        %v1588 = vand.u32 %v1586, 31
        %v1589 = vsub.s32 32, %v1588
        %v1590 = vshrl.u32 683565275, %v1589
        %v1591 = vshll.u32 683565275, %v1588
        %v1592 = vshrl.u32 2475754826, %v1589
        %v1593 = vor.u32 %v1591, %v1592
        %v1594 = vshll.u32 2475754826, %v1588
        %v1595 = vshrl.u32 2131351028, %v1589
        %v1596 = vor.u32 %v1594, %v1595
        %v1597 = vshll.u32 2131351028, %v1588
        %v1598 = vshrl.u32 2102212464, %v1589
        %v1599 = vor.u32 %v1597, %v1598
        %v1600 = vshll.u32 2102212464, %v1588
        %v1601 = vshrl.u32 920167782, %v1589
        %v1602 = vor.u32 %v1600, %v1601
        %v1603 = vshll.u32 920167782, %v1588
        %v1604 = vshrl.u32 1326507024, %v1589
        %v1605 = vor.u32 %v1603, %v1604
        %vm1606 = vcmp.lt.s32.totalorder %v1587, 1
        %vm1607 = vcmp.lt.s32.totalorder %v1587, 2
        %vm1608 = vcmp.lt.s32.totalorder %v1587, 3
        %vm1609 = vcmp.lt.s32.totalorder %v1587, 4
        %v1610 = vsel %vm1606, %v1590, %v1593
        %v1611 = vsel %vm1609, %v1599, 2102212464
        %v1612 = vsel %vm1608, %v1596, %v1611
        %v1613 = vsel %vm1607, %v1610, %v1612
        %v1614 = vsel %vm1606, %v1593, %v1596
        %v1615 = vsel %vm1609, %v1602, 920167782
        %v1616 = vsel %vm1608, %v1599, %v1615
        %v1617 = vsel %vm1607, %v1614, %v1616
        %v1618 = vsel %vm1606, %v1596, %v1599
        %v1619 = vsel %vm1609, %v1605, 1326507024
        %v1620 = vsel %vm1608, %v1602, %v1619
        %v1621 = vsel %vm1607, %v1618, %v1620
        %v1622 = vshll.u32 %v1582, 8
        %v1623 = vmul.u32.u64.compose %v1622, %v1621
        %v1624 = vextract.low.u32 %v1623
        %v1625 = vextract.high.u32 %v1623
        %v1626 = vmul.u32.u64.compose %v1622, %v1617
        %v1627 = vextract.low.u32 %v1626
        %v1628 = vextract.high.u32 %v1626
        %v1629 = vmul.u32 %v1622, %v1613
        %v1630 = vadd.s32 %v1625, %v1627
        %vm1631 = vc.u32 %v1625, %v1627
        %v1632 = vadd.s32 %v1628, 1
        %v1633 = vsel %vm1631, %v1632, %v1628
        %v1634 = vadd.s32 %v1629, %v1633
        %v1635 = vadd.s32 %v1634, 536870912
        %v1636 = vshrl.u32 %v1635, 30
        %v1637 = vshll.u32 %v1636, 30
        %v1638 = vsub.s32 %v1634, %v1637
        %vm1639 = vcmp.lt.s32.totalorder %v1638, 0
        %v1640 = vsub.s32 0, %v1638
        %v1641 = vsel %vm1639, %v1640, %v1638
        %v1642 = vclz %v1641
        %v1643 = vsub.s32 %v1642, 2
        %vm1644 = vcmp.gt.s32.totalorder 0, %v1643
        %v1645 = vsel %vm1644, 0, %v1643
        %v1646 = vsub.s32 32, %v1645
        %v1647 = vshll.u32 %v1638, %v1645
        %v1648 = vshrl.u32 %v1630, %v1646
        %v1649 = vor.u32 %v1647, %v1648
        %v1650 = vsub.s32 4294967266, %v1645
        %v1651 = vadd.s32 %v1650, 127
        %v1652 = vshll.u32 %v1651, 23
        %v1653 = vor.u32 4788187, %v1652
        %v1654 = vand.u32 2147483647, %v1653
        %v1656 = vcvt.s32.f32 %v1649
        %v1657 = vmul.f32 %v1656, %v1654
        %v1658 = vxor.u32 %v1657, 2147483648
        %v1659 = vsel %vm1576, %v1658, %v1657
        %v1660 = vsub.s32 4, %v1636
        %v1661 = vsel %vm1576, %v1660, %v1636
        %v1662 = vsel %vm1575, %v1363, %v1659
        %v1663 = vsel %vm1575, 0, %v1661
        %v1664 = vcosq.f32.pop %v1662
        %v1665 = vsinq.f32.pop %v1662
        %vm1666 = vweird.f32 %v1363
        %v1667 = vadd.s32 %v1663, 3
        %v1668 = vand.u32 %v1667, 3
        %vm1669 = vcmp.lt.s32.totalorder %v1668, 2
        %vm1670 = vcmp.eq.s32.totalorder %v1668, 0
        %v1671 = vxor.u32 %v1665, 2147483648
        %v1672 = vsel %vm1670, %v1664, %v1671
        %vm1673 = vcmp.eq.s32.totalorder %v1668, 2
        %v1674 = vxor.u32 %v1664, 2147483648
        %v1675 = vsel %vm1673, %v1674, %v1665
        %v1676 = vsel %vm1669, %v1672, %v1675
        %v1677 = vsel %vm1666, nan, %v1676
        %v1681 = vrot.slane %v1232, 4
        %v1682 = vrot.slane %v1237, 4
        %v1683 = vsel %vm1151, %v1681, %v1682
        %v1684 = vrot.slane %v1242, 4
        %v1685 = vsel %vm1151, %v1682, %v1684
        %v1689 = vmul.f32 %v1469, %v1683
        %v1690 = vmul.f32 %v1573, %v1685
        %v1691 = vmul.f32 %v1677, %v1684
        %v1692 = vadd.f32 %v1222, %v1689
        %v1693 = vadd.f32 %v1227, %v1690
        %v1694 = vadd.f32 %v1232, %v1691
        %v1695 = vld [vmem:[%s7] sm:$0xff]
        %v1696 = vld [vmem:[%s7 + $0x8] sm:$0xff]
        %v1697 = vld [vmem:[%s7 + $0x10] sm:$0xf]
        %v1698 = vld [vmem:[%s8] sm:$0xff]
        %v1699 = vld [vmem:[%s8 + $0x8] sm:$0xff]
        %v1700 = vld [vmem:[%s8 + $0x10] sm:$0xf]
        %1702 = vset.pattern.permute.xlu0 0
        %1703 = vperm.xlu0 %1702, %v1698
        %v1704 = vpop.permute.xlu0 %1703
        %1707 = vset.pattern.permute.xlu0 0
        %1708 = vperm.xlu0 %1707, %v1699
        %v1709 = vpop.permute.xlu0 %1708
        %1712 = vset.pattern.permute.xlu0 0
        %1713 = vperm.xlu0 %1712, %v1700
        %v1714 = vpop.permute.xlu0 %1713
        %v1717 = vsel %vm1135, %v1695, 0
        %v1720 = vsel %vm1135, %v1696, 0
        %v1723 = vsel %vm1135, %v1697, 0
        %v1726 = vsel %vm1151, %v1694, 0
        %1728 = vmatprep.subr.mxu0 0.0
        %1729 = vmatpush1.msra.mxu0 %v1692
        %1730 = vmatprep.subr.mxu0 0.0
        %1731 = vmatpush1.msra.mxu0 %v1693
        %1732 = vmatprep.subr.mxu0 0.0
        %1733 = vmatpush1.msra.mxu0 %v1726
        %1734 = vmatprep.subr.mxu0 0.0
        %1735 = vmatpush1.msra.mxu0 0.0
        %1736 = vmatprep.subr.mxu0 0.0
        %1737 = vmatpush1.msra.mxu0 0.0
        %1738 = vmatprep.subr.mxu0 0.0
        %1739 = vmatpush1.msra.mxu0 0.0
        %1740 = vmatprep.subr.mxu0 0.0
        %1741 = vmatpush1.msra.mxu0 0.0
        %1742 = vmatprep.subr.mxu0 0.0
        %1743 = vmatpush1.msra.mxu0 0.0
        %1744 = vmatprep.subr.mxu0 0.0
        %1745 = vmatpush1.msra.mxu0 0.0
        %1746 = vmatprep.subr.mxu0 0.0
        %1747 = vmatpush1.msra.mxu0 0.0
        %1748 = vmatprep.subr.mxu0 0.0
        %1749 = vmatpush1.msra.mxu0 0.0
        %1750 = vmatprep.subr.mxu0 0.0
        %1751 = vmatpush1.msra.mxu0 0.0
        %1752 = vmatprep.subr.mxu0 0.0
        %1753 = vmatpush1.msra.mxu0 0.0
        %1754 = vmatprep.subr.mxu0 0.0
        %1755 = vmatpush1.msra.mxu0 0.0
        %1756 = vmatprep.subr.mxu0 0.0
        %1757 = vmatpush1.msra.mxu0 0.0
        %1758 = vmatprep.subr.mxu0 0.0
        %1759 = vmatpush1.msra.mxu0 0.0
        %1760 = vmatprep.subr.mxu0 0.0
        %1761 = vmatpush1.msra.mxu0 0.0
        %1762 = vmatprep.subr.mxu0 0.0
        %1763 = vmatpush1.msra.mxu0 0.0
        %1764 = vmatprep.subr.mxu0 0.0
        %1765 = vmatpush1.msra.mxu0 0.0
        %1766 = vmatprep.subr.mxu0 0.0
        %1767 = vmatpush1.msra.mxu0 0.0
        %1768 = vmatprep.subr.mxu0 0.0
        %1769 = vmatpush1.msra.mxu0 0.0
        %1770 = vmatprep.subr.mxu0 0.0
        %1771 = vmatpush1.msra.mxu0 0.0
        %1772 = vmatprep.subr.mxu0 0.0
        %1773 = vmatpush1.msra.mxu0 0.0
        %1774 = vmatprep.subr.mxu0 0.0
        %1775 = vmatpush1.msra.mxu0 0.0
        %1776 = vmatprep.subr.mxu0 0.0
        %1777 = vmatpush1.msra.mxu0 0.0
        %1778 = vmatprep.subr.mxu0 0.0
        %1779 = vmatpush1.msra.mxu0 0.0
        %1780 = vmatprep.subr.mxu0 0.0
        %1781 = vmatpush1.msra.mxu0 0.0
        %1782 = vmatprep.subr.mxu0 0.0
        %1783 = vmatpush1.msra.mxu0 0.0
        %1784 = vmatprep.subr.mxu0 0.0
        %1785 = vmatpush1.msra.mxu0 0.0
        %1786 = vmatprep.subr.mxu0 0.0
        %1787 = vmatpush1.msra.mxu0 0.0
        %1788 = vmatprep.subr.mxu0 0.0
        %1789 = vmatpush1.msra.mxu0 0.0
        %1790 = vmatprep.subr.mxu0 0.0
        %1791 = vmatpush1.msra.mxu0 0.0
        %1792 = vmatprep.mubr.f32.mxu0 0.0
        %1793 = vmatmul.mubr.f32.gmra.mrb[0].mxu0 %v1717
        %v1794 = vpop.f32.mrb[0].mxu0
        %v1795 = vadd.f32 %v1704, %v1794
        %v1796 = vpop.f32.mrb[0].mxu0
        %1797 = vmatprep.mubr.f32.mxu0 0.0
        %1798 = vmatmul.mubr.f32.gmra.mrb[0].mxu0 %v1720
        %v1799 = vpop.f32.mrb[0].mxu0
        %v1800 = vadd.f32 %v1709, %v1799
        %v1801 = vpop.f32.mrb[0].mxu0
        %1802 = vmatprep.mubr.f32.mxu0 0.0
        %1803 = vmatmul.mubr.f32.gmra.mrb[0].mxu0 %v1723
        %v1804 = vpop.f32.mrb[0].mxu0
        %v1805 = vadd.f32 %v1714, %v1804
        %v1806 = vpop.f32.mrb[0].mxu0
        %1807 = vdwg.mxu0
        %v1808 = vand.u32 2147483647, %v1795
        %vm1809 = vcmp.le.f32.partialorder %v1808, 0.7853982
        %vm1810 = vcmp.lt.s32.totalorder %v1795, 0
        %v1811 = vand.u32 %v1795, 2139095040
        %v1812 = vshrl.u32 %v1811, 23
        %v1813 = vsub.s32 %v1812, 127
        %v1814 = vand.u32 2147483647, %v1795
        %v1815 = vand.u32 %v1814, 8388607
        %v1816 = vor.u32 %v1815, 8388608
        %v1817 = vsub.s32 0, %v1816
        %v1818 = vadd.s32 %v1813, 1
        %vm1819 = vcmp.gt.s32.totalorder %v1818, 0
        %v1820 = vsel %vm1819, %v1818, 0
        %v1821 = vshrl.u32 %v1820, 5
        %v1822 = vand.u32 %v1820, 31
        %v1823 = vsub.s32 32, %v1822
        %v1824 = vshrl.u32 683565275, %v1823
        %v1825 = vshll.u32 683565275, %v1822
        %v1826 = vshrl.u32 2475754826, %v1823
        %v1827 = vor.u32 %v1825, %v1826
        %v1828 = vshll.u32 2475754826, %v1822
        %v1829 = vshrl.u32 2131351028, %v1823
        %v1830 = vor.u32 %v1828, %v1829
        %v1831 = vshll.u32 2131351028, %v1822
        %v1832 = vshrl.u32 2102212464, %v1823
        %v1833 = vor.u32 %v1831, %v1832
        %v1834 = vshll.u32 2102212464, %v1822
        %v1835 = vshrl.u32 920167782, %v1823
        %v1836 = vor.u32 %v1834, %v1835
        %v1837 = vshll.u32 920167782, %v1822
        %v1838 = vshrl.u32 1326507024, %v1823
        %v1839 = vor.u32 %v1837, %v1838
        %vm1840 = vcmp.lt.s32.totalorder %v1821, 1
        %vm1841 = vcmp.lt.s32.totalorder %v1821, 2
        %vm1842 = vcmp.lt.s32.totalorder %v1821, 3
        %vm1843 = vcmp.lt.s32.totalorder %v1821, 4
        %v1844 = vsel %vm1840, %v1824, %v1827
        %v1845 = vsel %vm1843, %v1833, 2102212464
        %v1846 = vsel %vm1842, %v1830, %v1845
        %v1847 = vsel %vm1841, %v1844, %v1846
        %v1848 = vsel %vm1840, %v1827, %v1830
        %v1849 = vsel %vm1843, %v1836, 920167782
        %v1850 = vsel %vm1842, %v1833, %v1849
        %v1851 = vsel %vm1841, %v1848, %v1850
        %v1852 = vsel %vm1840, %v1830, %v1833
        %v1853 = vsel %vm1843, %v1839, 1326507024
        %v1854 = vsel %vm1842, %v1836, %v1853
        %v1855 = vsel %vm1841, %v1852, %v1854
        %v1856 = vshll.u32 %v1816, 8
        %v1857 = vmul.u32.u64.compose %v1856, %v1855
        %v1858 = vextract.low.u32 %v1857
        %v1859 = vextract.high.u32 %v1857
        %v1860 = vmul.u32.u64.compose %v1856, %v1851
        %v1861 = vextract.low.u32 %v1860
        %v1862 = vextract.high.u32 %v1860
        %v1863 = vmul.u32 %v1856, %v1847
        %v1864 = vadd.s32 %v1859, %v1861
        %vm1865 = vc.u32 %v1859, %v1861
        %v1866 = vadd.s32 %v1862, 1
        %v1867 = vsel %vm1865, %v1866, %v1862
        %v1868 = vadd.s32 %v1863, %v1867
        %v1869 = vadd.s32 %v1868, 536870912
        %v1870 = vshrl.u32 %v1869, 30
        %v1871 = vshll.u32 %v1870, 30
        %v1872 = vsub.s32 %v1868, %v1871
        %vm1873 = vcmp.lt.s32.totalorder %v1872, 0
        %v1874 = vsub.s32 0, %v1872
        %v1875 = vsel %vm1873, %v1874, %v1872
        %v1876 = vclz %v1875
        %v1877 = vsub.s32 %v1876, 2
        %vm1878 = vcmp.gt.s32.totalorder 0, %v1877
        %v1879 = vsel %vm1878, 0, %v1877
        %v1880 = vsub.s32 32, %v1879
        %v1881 = vshll.u32 %v1872, %v1879
        %v1882 = vshrl.u32 %v1864, %v1880
        %v1883 = vor.u32 %v1881, %v1882
        %v1884 = vsub.s32 4294967266, %v1879
        %v1885 = vadd.s32 %v1884, 127
        %v1886 = vshll.u32 %v1885, 23
        %v1887 = vor.u32 4788187, %v1886
        %v1888 = vand.u32 2147483647, %v1887
        %v1890 = vcvt.s32.f32 %v1883
        %v1891 = vmul.f32 %v1890, %v1888
        %v1892 = vxor.u32 %v1891, 2147483648
        %v1893 = vsel %vm1810, %v1892, %v1891
        %v1894 = vsub.s32 4, %v1870
        %v1895 = vsel %vm1810, %v1894, %v1870
        %v1896 = vsel %vm1809, %v1795, %v1893
        %v1897 = vsel %vm1809, 0, %v1895
        %v1898 = vcosq.f32.pop %v1896
        %v1899 = vsinq.f32.pop %v1896
        %vm1900 = vweird.f32 %v1795
        %v1901 = vadd.s32 %v1897, 3
        %v1902 = vand.u32 %v1901, 3
        %vm1903 = vcmp.lt.s32.totalorder %v1902, 2
        %vm1904 = vcmp.eq.s32.totalorder %v1902, 0
        %v1905 = vxor.u32 %v1899, 2147483648
        %v1906 = vsel %vm1904, %v1898, %v1905
        %vm1907 = vcmp.eq.s32.totalorder %v1902, 2
        %v1908 = vxor.u32 %v1898, 2147483648
        %v1909 = vsel %vm1907, %v1908, %v1899
        %v1910 = vsel %vm1903, %v1906, %v1909
        %v1911 = vsel %vm1900, nan, %v1910
        %v1912 = vand.u32 2147483647, %v1800
        %vm1913 = vcmp.le.f32.partialorder %v1912, 0.7853982
        %vm1914 = vcmp.lt.s32.totalorder %v1800, 0
        %v1915 = vand.u32 %v1800, 2139095040
        %v1916 = vshrl.u32 %v1915, 23
        %v1917 = vsub.s32 %v1916, 127
        %v1918 = vand.u32 2147483647, %v1800
        %v1919 = vand.u32 %v1918, 8388607
        %v1920 = vor.u32 %v1919, 8388608
        %v1921 = vsub.s32 0, %v1920
        %v1922 = vadd.s32 %v1917, 1
        %vm1923 = vcmp.gt.s32.totalorder %v1922, 0
        %v1924 = vsel %vm1923, %v1922, 0
        %v1925 = vshrl.u32 %v1924, 5
        %v1926 = vand.u32 %v1924, 31
        %v1927 = vsub.s32 32, %v1926
        %v1928 = vshrl.u32 683565275, %v1927
        %v1929 = vshll.u32 683565275, %v1926
        %v1930 = vshrl.u32 2475754826, %v1927
        %v1931 = vor.u32 %v1929, %v1930
        %v1932 = vshll.u32 2475754826, %v1926
        %v1933 = vshrl.u32 2131351028, %v1927
        %v1934 = vor.u32 %v1932, %v1933
        %v1935 = vshll.u32 2131351028, %v1926
        %v1936 = vshrl.u32 2102212464, %v1927
        %v1937 = vor.u32 %v1935, %v1936
        %v1938 = vshll.u32 2102212464, %v1926
        %v1939 = vshrl.u32 920167782, %v1927
        %v1940 = vor.u32 %v1938, %v1939
        %v1941 = vshll.u32 920167782, %v1926
        %v1942 = vshrl.u32 1326507024, %v1927
        %v1943 = vor.u32 %v1941, %v1942
        %vm1944 = vcmp.lt.s32.totalorder %v1925, 1
        %vm1945 = vcmp.lt.s32.totalorder %v1925, 2
        %vm1946 = vcmp.lt.s32.totalorder %v1925, 3
        %vm1947 = vcmp.lt.s32.totalorder %v1925, 4
        %v1948 = vsel %vm1944, %v1928, %v1931
        %v1949 = vsel %vm1947, %v1937, 2102212464
        %v1950 = vsel %vm1946, %v1934, %v1949
        %v1951 = vsel %vm1945, %v1948, %v1950
        %v1952 = vsel %vm1944, %v1931, %v1934
        %v1953 = vsel %vm1947, %v1940, 920167782
        %v1954 = vsel %vm1946, %v1937, %v1953
        %v1955 = vsel %vm1945, %v1952, %v1954
        %v1956 = vsel %vm1944, %v1934, %v1937
        %v1957 = vsel %vm1947, %v1943, 1326507024
        %v1958 = vsel %vm1946, %v1940, %v1957
        %v1959 = vsel %vm1945, %v1956, %v1958
        %v1960 = vshll.u32 %v1920, 8
        %v1961 = vmul.u32.u64.compose %v1960, %v1959
        %v1962 = vextract.low.u32 %v1961
        %v1963 = vextract.high.u32 %v1961
        %v1964 = vmul.u32.u64.compose %v1960, %v1955
        %v1965 = vextract.low.u32 %v1964
        %v1966 = vextract.high.u32 %v1964
        %v1967 = vmul.u32 %v1960, %v1951
        %v1968 = vadd.s32 %v1963, %v1965
        %vm1969 = vc.u32 %v1963, %v1965
        %v1970 = vadd.s32 %v1966, 1
        %v1971 = vsel %vm1969, %v1970, %v1966
        %v1972 = vadd.s32 %v1967, %v1971
        %v1973 = vadd.s32 %v1972, 536870912
        %v1974 = vshrl.u32 %v1973, 30
        %v1975 = vshll.u32 %v1974, 30
        %v1976 = vsub.s32 %v1972, %v1975
        %vm1977 = vcmp.lt.s32.totalorder %v1976, 0
        %v1978 = vsub.s32 0, %v1976
        %v1979 = vsel %vm1977, %v1978, %v1976
        %v1980 = vclz %v1979
        %v1981 = vsub.s32 %v1980, 2
        %vm1982 = vcmp.gt.s32.totalorder 0, %v1981
        %v1983 = vsel %vm1982, 0, %v1981
        %v1984 = vsub.s32 32, %v1983
        %v1985 = vshll.u32 %v1976, %v1983
        %v1986 = vshrl.u32 %v1968, %v1984
        %v1987 = vor.u32 %v1985, %v1986
        %v1988 = vsub.s32 4294967266, %v1983
        %v1989 = vadd.s32 %v1988, 127
        %v1990 = vshll.u32 %v1989, 23
        %v1991 = vor.u32 4788187, %v1990
        %v1992 = vand.u32 2147483647, %v1991
        %v1994 = vcvt.s32.f32 %v1987
        %v1995 = vmul.f32 %v1994, %v1992
        %v1996 = vxor.u32 %v1995, 2147483648
        %v1997 = vsel %vm1914, %v1996, %v1995
        %v1998 = vsub.s32 4, %v1974
        %v1999 = vsel %vm1914, %v1998, %v1974
        %v2000 = vsel %vm1913, %v1800, %v1997
        %v2001 = vsel %vm1913, 0, %v1999
        %v2002 = vcosq.f32.pop %v2000
        %v2003 = vsinq.f32.pop %v2000
        %vm2004 = vweird.f32 %v1800
        %v2005 = vadd.s32 %v2001, 3
        %v2006 = vand.u32 %v2005, 3
        %vm2007 = vcmp.lt.s32.totalorder %v2006, 2
        %vm2008 = vcmp.eq.s32.totalorder %v2006, 0
        %v2009 = vxor.u32 %v2003, 2147483648
        %v2010 = vsel %vm2008, %v2002, %v2009
        %vm2011 = vcmp.eq.s32.totalorder %v2006, 2
        %v2012 = vxor.u32 %v2002, 2147483648
        %v2013 = vsel %vm2011, %v2012, %v2003
        %v2014 = vsel %vm2007, %v2010, %v2013
        %v2015 = vsel %vm2004, nan, %v2014
        %v2016 = vand.u32 2147483647, %v1805
        %vm2017 = vcmp.le.f32.partialorder %v2016, 0.7853982
        %vm2018 = vcmp.lt.s32.totalorder %v1805, 0
        %v2019 = vand.u32 %v1805, 2139095040
        %v2020 = vshrl.u32 %v2019, 23
        %v2021 = vsub.s32 %v2020, 127
        %v2022 = vand.u32 2147483647, %v1805
        %v2023 = vand.u32 %v2022, 8388607
        %v2024 = vor.u32 %v2023, 8388608
        %v2025 = vsub.s32 0, %v2024
        %v2026 = vadd.s32 %v2021, 1
        %vm2027 = vcmp.gt.s32.totalorder %v2026, 0
        %v2028 = vsel %vm2027, %v2026, 0
        %v2029 = vshrl.u32 %v2028, 5
        %v2030 = vand.u32 %v2028, 31
        %v2031 = vsub.s32 32, %v2030
        %v2032 = vshrl.u32 683565275, %v2031
        %v2033 = vshll.u32 683565275, %v2030
        %v2034 = vshrl.u32 2475754826, %v2031
        %v2035 = vor.u32 %v2033, %v2034
        %v2036 = vshll.u32 2475754826, %v2030
        %v2037 = vshrl.u32 2131351028, %v2031
        %v2038 = vor.u32 %v2036, %v2037
        %v2039 = vshll.u32 2131351028, %v2030
        %v2040 = vshrl.u32 2102212464, %v2031
        %v2041 = vor.u32 %v2039, %v2040
        %v2042 = vshll.u32 2102212464, %v2030
        %v2043 = vshrl.u32 920167782, %v2031
        %v2044 = vor.u32 %v2042, %v2043
        %v2045 = vshll.u32 920167782, %v2030
        %v2046 = vshrl.u32 1326507024, %v2031
        %v2047 = vor.u32 %v2045, %v2046
        %vm2048 = vcmp.lt.s32.totalorder %v2029, 1
        %vm2049 = vcmp.lt.s32.totalorder %v2029, 2
        %vm2050 = vcmp.lt.s32.totalorder %v2029, 3
        %vm2051 = vcmp.lt.s32.totalorder %v2029, 4
        %v2052 = vsel %vm2048, %v2032, %v2035
        %v2053 = vsel %vm2051, %v2041, 2102212464
        %v2054 = vsel %vm2050, %v2038, %v2053
        %v2055 = vsel %vm2049, %v2052, %v2054
        %v2056 = vsel %vm2048, %v2035, %v2038
        %v2057 = vsel %vm2051, %v2044, 920167782
        %v2058 = vsel %vm2050, %v2041, %v2057
        %v2059 = vsel %vm2049, %v2056, %v2058
        %v2060 = vsel %vm2048, %v2038, %v2041
        %v2061 = vsel %vm2051, %v2047, 1326507024
        %v2062 = vsel %vm2050, %v2044, %v2061
        %v2063 = vsel %vm2049, %v2060, %v2062
        %v2064 = vshll.u32 %v2024, 8
        %v2065 = vmul.u32.u64.compose %v2064, %v2063
        %v2066 = vextract.low.u32 %v2065
        %v2067 = vextract.high.u32 %v2065
        %v2068 = vmul.u32.u64.compose %v2064, %v2059
        %v2069 = vextract.low.u32 %v2068
        %v2070 = vextract.high.u32 %v2068
        %v2071 = vmul.u32 %v2064, %v2055
        %v2072 = vadd.s32 %v2067, %v2069
        %vm2073 = vc.u32 %v2067, %v2069
        %v2074 = vadd.s32 %v2070, 1
        %v2075 = vsel %vm2073, %v2074, %v2070
        %v2076 = vadd.s32 %v2071, %v2075
        %v2077 = vadd.s32 %v2076, 536870912
        %v2078 = vshrl.u32 %v2077, 30
        %v2079 = vshll.u32 %v2078, 30
        %v2080 = vsub.s32 %v2076, %v2079
        %vm2081 = vcmp.lt.s32.totalorder %v2080, 0
        %v2082 = vsub.s32 0, %v2080
        %v2083 = vsel %vm2081, %v2082, %v2080
        %v2084 = vclz %v2083
        %v2085 = vsub.s32 %v2084, 2
        %vm2086 = vcmp.gt.s32.totalorder 0, %v2085
        %v2087 = vsel %vm2086, 0, %v2085
        %v2088 = vsub.s32 32, %v2087
        %v2089 = vshll.u32 %v2080, %v2087
        %v2090 = vshrl.u32 %v2072, %v2088
        %v2091 = vor.u32 %v2089, %v2090
        %v2092 = vsub.s32 4294967266, %v2087
        %v2093 = vadd.s32 %v2092, 127
        %v2094 = vshll.u32 %v2093, 23
        %v2095 = vor.u32 4788187, %v2094
        %v2096 = vand.u32 2147483647, %v2095
        %v2098 = vcvt.s32.f32 %v2091
        %v2099 = vmul.f32 %v2098, %v2096
        %v2100 = vxor.u32 %v2099, 2147483648
        %v2101 = vsel %vm2018, %v2100, %v2099
        %v2102 = vsub.s32 4, %v2078
        %v2103 = vsel %vm2018, %v2102, %v2078
        %v2104 = vsel %vm2017, %v1805, %v2101
        %v2105 = vsel %vm2017, 0, %v2103
        %v2106 = vcosq.f32.pop %v2104
        %v2107 = vsinq.f32.pop %v2104
        %vm2108 = vweird.f32 %v1805
        %v2109 = vadd.s32 %v2105, 3
        %v2110 = vand.u32 %v2109, 3
        %vm2111 = vcmp.lt.s32.totalorder %v2110, 2
        %vm2112 = vcmp.eq.s32.totalorder %v2110, 0
        %v2113 = vxor.u32 %v2107, 2147483648
        %v2114 = vsel %vm2112, %v2106, %v2113
        %vm2115 = vcmp.eq.s32.totalorder %v2110, 2
        %v2116 = vxor.u32 %v2106, 2147483648
        %v2117 = vsel %vm2115, %v2116, %v2107
        %v2118 = vsel %vm2111, %v2114, %v2117
        %v2119 = vsel %vm2108, nan, %v2118
        %v2120 = vmul.f32 %v1911, %v1683
        %v2121 = vmul.f32 %v2015, %v1685
        %v2122 = vmul.f32 %v2119, %v1684
        %v2123 = vadd.f32 %v1222, %v2120
        %v2124 = vadd.f32 %v1227, %v2121
        %v2125 = vadd.f32 %v1232, %v2122
        %v2126 = vld [vmem:[%s9] sm:$0xff]
        %v2127 = vld [vmem:[%s9 + $0x8] sm:$0xff]
        %v2128 = vld [vmem:[%s9 + $0x10] sm:$0xf]
        %v2129 = vld [vmem:[%s10] sm:$0xff]
        %v2130 = vld [vmem:[%s10 + $0x8] sm:$0xff]
        %v2131 = vld [vmem:[%s10 + $0x10] sm:$0xf]
        %2133 = vset.pattern.permute.xlu0 0
        %2134 = vperm.xlu0 %2133, %v2129
        %v2135 = vpop.permute.xlu0 %2134
        %2138 = vset.pattern.permute.xlu0 0
        %2139 = vperm.xlu0 %2138, %v2130
        %v2140 = vpop.permute.xlu0 %2139
        %2143 = vset.pattern.permute.xlu0 0
        %2144 = vperm.xlu0 %2143, %v2131
        %v2145 = vpop.permute.xlu0 %2144
        %v2148 = vsel %vm1135, %v2126, 0
        %v2151 = vsel %vm1135, %v2127, 0
        %v2154 = vsel %vm1135, %v2128, 0
        %v2157 = vsel %vm1151, %v2125, 0
        %2159 = vmatprep.subr.mxu0 0.0
        %2160 = vmatpush1.msra.mxu0 %v2123
        %2161 = vmatprep.subr.mxu0 0.0
        %2162 = vmatpush1.msra.mxu0 %v2124
        %2163 = vmatprep.subr.mxu0 0.0
        %2164 = vmatpush1.msra.mxu0 %v2157
        %2165 = vmatprep.subr.mxu0 0.0
        %2166 = vmatpush1.msra.mxu0 0.0
        %2167 = vmatprep.subr.mxu0 0.0
        %2168 = vmatpush1.msra.mxu0 0.0
        %2169 = vmatprep.subr.mxu0 0.0
        %2170 = vmatpush1.msra.mxu0 0.0
        %2171 = vmatprep.subr.mxu0 0.0
        %2172 = vmatpush1.msra.mxu0 0.0
        %2173 = vmatprep.subr.mxu0 0.0
        %2174 = vmatpush1.msra.mxu0 0.0
        %2175 = vmatprep.subr.mxu0 0.0
        %2176 = vmatpush1.msra.mxu0 0.0
        %2177 = vmatprep.subr.mxu0 0.0
        %2178 = vmatpush1.msra.mxu0 0.0
        %2179 = vmatprep.subr.mxu0 0.0
        %2180 = vmatpush1.msra.mxu0 0.0
        %2181 = vmatprep.subr.mxu0 0.0
        %2182 = vmatpush1.msra.mxu0 0.0
        %2183 = vmatprep.subr.mxu0 0.0
        %2184 = vmatpush1.msra.mxu0 0.0
        %2185 = vmatprep.subr.mxu0 0.0
        %2186 = vmatpush1.msra.mxu0 0.0
        %2187 = vmatprep.subr.mxu0 0.0
        %2188 = vmatpush1.msra.mxu0 0.0
        %2189 = vmatprep.subr.mxu0 0.0
        %2190 = vmatpush1.msra.mxu0 0.0
        %2191 = vmatprep.subr.mxu0 0.0
        %2192 = vmatpush1.msra.mxu0 0.0
        %2193 = vmatprep.subr.mxu0 0.0
        %2194 = vmatpush1.msra.mxu0 0.0
        %2195 = vmatprep.subr.mxu0 0.0
        %2196 = vmatpush1.msra.mxu0 0.0
        %2197 = vmatprep.subr.mxu0 0.0
        %2198 = vmatpush1.msra.mxu0 0.0
        %2199 = vmatprep.subr.mxu0 0.0
        %2200 = vmatpush1.msra.mxu0 0.0
        %2201 = vmatprep.subr.mxu0 0.0
        %2202 = vmatpush1.msra.mxu0 0.0
        %2203 = vmatprep.subr.mxu0 0.0
        %2204 = vmatpush1.msra.mxu0 0.0
        %2205 = vmatprep.subr.mxu0 0.0
        %2206 = vmatpush1.msra.mxu0 0.0
        %2207 = vmatprep.subr.mxu0 0.0
        %2208 = vmatpush1.msra.mxu0 0.0
        %2209 = vmatprep.subr.mxu0 0.0
        %2210 = vmatpush1.msra.mxu0 0.0
        %2211 = vmatprep.subr.mxu0 0.0
        %2212 = vmatpush1.msra.mxu0 0.0
        %2213 = vmatprep.subr.mxu0 0.0
        %2214 = vmatpush1.msra.mxu0 0.0
        %2215 = vmatprep.subr.mxu0 0.0
        %2216 = vmatpush1.msra.mxu0 0.0
        %2217 = vmatprep.subr.mxu0 0.0
        %2218 = vmatpush1.msra.mxu0 0.0
        %2219 = vmatprep.subr.mxu0 0.0
        %2220 = vmatpush1.msra.mxu0 0.0
        %2221 = vmatprep.subr.mxu0 0.0
        %2222 = vmatpush1.msra.mxu0 0.0
        %2223 = vmatprep.mubr.f32.mxu0 0.0
        %2224 = vmatmul.mubr.f32.gmra.mrb[0].mxu0 %v2148
        %v2225 = vpop.f32.mrb[0].mxu0
        %v2226 = vadd.f32 %v2135, %v2225
        %v2227 = vpop.f32.mrb[0].mxu0
        %2228 = vmatprep.mubr.f32.mxu0 0.0
        %2229 = vmatmul.mubr.f32.gmra.mrb[0].mxu0 %v2151
        %v2230 = vpop.f32.mrb[0].mxu0
        %v2231 = vadd.f32 %v2140, %v2230
        %v2232 = vpop.f32.mrb[0].mxu0
        %2233 = vmatprep.mubr.f32.mxu0 0.0
        %2234 = vmatmul.mubr.f32.gmra.mrb[0].mxu0 %v2154
        %v2235 = vpop.f32.mrb[0].mxu0
        %v2236 = vadd.f32 %v2145, %v2235
        %v2237 = vpop.f32.mrb[0].mxu0
        %2238 = vdwg.mxu0
        %v2239 = vand.u32 2147483647, %v2226
        %vm2240 = vcmp.le.f32.partialorder %v2239, 0.7853982
        %vm2241 = vcmp.lt.s32.totalorder %v2226, 0
        %v2242 = vand.u32 %v2226, 2139095040
        %v2243 = vshrl.u32 %v2242, 23
        %v2244 = vsub.s32 %v2243, 127
        %v2245 = vand.u32 2147483647, %v2226
        %v2246 = vand.u32 %v2245, 8388607
        %v2247 = vor.u32 %v2246, 8388608
        %v2248 = vsub.s32 0, %v2247
        %v2249 = vadd.s32 %v2244, 1
        %vm2250 = vcmp.gt.s32.totalorder %v2249, 0
        %v2251 = vsel %vm2250, %v2249, 0
        %v2252 = vshrl.u32 %v2251, 5
        %v2253 = vand.u32 %v2251, 31
        %v2254 = vsub.s32 32, %v2253
        %v2255 = vshrl.u32 683565275, %v2254
        %v2256 = vshll.u32 683565275, %v2253
        %v2257 = vshrl.u32 2475754826, %v2254
        %v2258 = vor.u32 %v2256, %v2257
        %v2259 = vshll.u32 2475754826, %v2253
        %v2260 = vshrl.u32 2131351028, %v2254
        %v2261 = vor.u32 %v2259, %v2260
        %v2262 = vshll.u32 2131351028, %v2253
        %v2263 = vshrl.u32 2102212464, %v2254
        %v2264 = vor.u32 %v2262, %v2263
        %v2265 = vshll.u32 2102212464, %v2253
        %v2266 = vshrl.u32 920167782, %v2254
        %v2267 = vor.u32 %v2265, %v2266
        %v2268 = vshll.u32 920167782, %v2253
        %v2269 = vshrl.u32 1326507024, %v2254
        %v2270 = vor.u32 %v2268, %v2269
        %vm2271 = vcmp.lt.s32.totalorder %v2252, 1
        %vm2272 = vcmp.lt.s32.totalorder %v2252, 2
        %vm2273 = vcmp.lt.s32.totalorder %v2252, 3
        %vm2274 = vcmp.lt.s32.totalorder %v2252, 4
        %v2275 = vsel %vm2271, %v2255, %v2258
        %v2276 = vsel %vm2274, %v2264, 2102212464
        %v2277 = vsel %vm2273, %v2261, %v2276
        %v2278 = vsel %vm2272, %v2275, %v2277
        %v2279 = vsel %vm2271, %v2258, %v2261
        %v2280 = vsel %vm2274, %v2267, 920167782
        %v2281 = vsel %vm2273, %v2264, %v2280
        %v2282 = vsel %vm2272, %v2279, %v2281
        %v2283 = vsel %vm2271, %v2261, %v2264
        %v2284 = vsel %vm2274, %v2270, 1326507024
        %v2285 = vsel %vm2273, %v2267, %v2284
        %v2286 = vsel %vm2272, %v2283, %v2285
        %v2287 = vshll.u32 %v2247, 8
        %v2288 = vmul.u32.u64.compose %v2287, %v2286
        %v2289 = vextract.low.u32 %v2288
        %v2290 = vextract.high.u32 %v2288
        %v2291 = vmul.u32.u64.compose %v2287, %v2282
        %v2292 = vextract.low.u32 %v2291
        %v2293 = vextract.high.u32 %v2291
        %v2294 = vmul.u32 %v2287, %v2278
        %v2295 = vadd.s32 %v2290, %v2292
        %vm2296 = vc.u32 %v2290, %v2292
        %v2297 = vadd.s32 %v2293, 1
        %v2298 = vsel %vm2296, %v2297, %v2293
        %v2299 = vadd.s32 %v2294, %v2298
        %v2300 = vadd.s32 %v2299, 536870912
        %v2301 = vshrl.u32 %v2300, 30
        %v2302 = vshll.u32 %v2301, 30
        %v2303 = vsub.s32 %v2299, %v2302
        %vm2304 = vcmp.lt.s32.totalorder %v2303, 0
        %v2305 = vsub.s32 0, %v2303
        %v2306 = vsel %vm2304, %v2305, %v2303
        %v2307 = vclz %v2306
        %v2308 = vsub.s32 %v2307, 2
        %vm2309 = vcmp.gt.s32.totalorder 0, %v2308
        %v2310 = vsel %vm2309, 0, %v2308
        %v2311 = vsub.s32 32, %v2310
        %v2312 = vshll.u32 %v2303, %v2310
        %v2313 = vshrl.u32 %v2295, %v2311
        %v2314 = vor.u32 %v2312, %v2313
        %v2315 = vsub.s32 4294967266, %v2310
        %v2316 = vadd.s32 %v2315, 127
        %v2317 = vshll.u32 %v2316, 23
        %v2318 = vor.u32 4788187, %v2317
        %v2319 = vand.u32 2147483647, %v2318
        %v2321 = vcvt.s32.f32 %v2314
        %v2322 = vmul.f32 %v2321, %v2319
        %v2323 = vxor.u32 %v2322, 2147483648
        %v2324 = vsel %vm2241, %v2323, %v2322
        %v2325 = vsub.s32 4, %v2301
        %v2326 = vsel %vm2241, %v2325, %v2301
        %v2327 = vsel %vm2240, %v2226, %v2324
        %v2328 = vsel %vm2240, 0, %v2326
        %v2329 = vcosq.f32.pop %v2327
        %v2330 = vsinq.f32.pop %v2327
        %vm2331 = vweird.f32 %v2226
        %v2332 = vadd.s32 %v2328, 3
        %v2333 = vand.u32 %v2332, 3
        %vm2334 = vcmp.lt.s32.totalorder %v2333, 2
        %vm2335 = vcmp.eq.s32.totalorder %v2333, 0
        %v2336 = vxor.u32 %v2330, 2147483648
        %v2337 = vsel %vm2335, %v2329, %v2336
        %vm2338 = vcmp.eq.s32.totalorder %v2333, 2
        %v2339 = vxor.u32 %v2329, 2147483648
        %v2340 = vsel %vm2338, %v2339, %v2330
        %v2341 = vsel %vm2334, %v2337, %v2340
        %v2342 = vsel %vm2331, nan, %v2341
        %v2343 = vand.u32 2147483647, %v2231
        %vm2344 = vcmp.le.f32.partialorder %v2343, 0.7853982
        %vm2345 = vcmp.lt.s32.totalorder %v2231, 0
        %v2346 = vand.u32 %v2231, 2139095040
        %v2347 = vshrl.u32 %v2346, 23
        %v2348 = vsub.s32 %v2347, 127
        %v2349 = vand.u32 2147483647, %v2231
        %v2350 = vand.u32 %v2349, 8388607
        %v2351 = vor.u32 %v2350, 8388608
        %v2352 = vsub.s32 0, %v2351
        %v2353 = vadd.s32 %v2348, 1
        %vm2354 = vcmp.gt.s32.totalorder %v2353, 0
        %v2355 = vsel %vm2354, %v2353, 0
        %v2356 = vshrl.u32 %v2355, 5
        %v2357 = vand.u32 %v2355, 31
        %v2358 = vsub.s32 32, %v2357
        %v2359 = vshrl.u32 683565275, %v2358
        %v2360 = vshll.u32 683565275, %v2357
        %v2361 = vshrl.u32 2475754826, %v2358
        %v2362 = vor.u32 %v2360, %v2361
        %v2363 = vshll.u32 2475754826, %v2357
        %v2364 = vshrl.u32 2131351028, %v2358
        %v2365 = vor.u32 %v2363, %v2364
        %v2366 = vshll.u32 2131351028, %v2357
        %v2367 = vshrl.u32 2102212464, %v2358
        %v2368 = vor.u32 %v2366, %v2367
        %v2369 = vshll.u32 2102212464, %v2357
        %v2370 = vshrl.u32 920167782, %v2358
        %v2371 = vor.u32 %v2369, %v2370
        %v2372 = vshll.u32 920167782, %v2357
        %v2373 = vshrl.u32 1326507024, %v2358
        %v2374 = vor.u32 %v2372, %v2373
        %vm2375 = vcmp.lt.s32.totalorder %v2356, 1
        %vm2376 = vcmp.lt.s32.totalorder %v2356, 2
        %vm2377 = vcmp.lt.s32.totalorder %v2356, 3
        %vm2378 = vcmp.lt.s32.totalorder %v2356, 4
        %v2379 = vsel %vm2375, %v2359, %v2362
        %v2380 = vsel %vm2378, %v2368, 2102212464
        %v2381 = vsel %vm2377, %v2365, %v2380
        %v2382 = vsel %vm2376, %v2379, %v2381
        %v2383 = vsel %vm2375, %v2362, %v2365
        %v2384 = vsel %vm2378, %v2371, 920167782
        %v2385 = vsel %vm2377, %v2368, %v2384
        %v2386 = vsel %vm2376, %v2383, %v2385
        %v2387 = vsel %vm2375, %v2365, %v2368
        %v2388 = vsel %vm2378, %v2374, 1326507024
        %v2389 = vsel %vm2377, %v2371, %v2388
        %v2390 = vsel %vm2376, %v2387, %v2389
        %v2391 = vshll.u32 %v2351, 8
        %v2392 = vmul.u32.u64.compose %v2391, %v2390
        %v2393 = vextract.low.u32 %v2392
        %v2394 = vextract.high.u32 %v2392
        %v2395 = vmul.u32.u64.compose %v2391, %v2386
        %v2396 = vextract.low.u32 %v2395
        %v2397 = vextract.high.u32 %v2395
        %v2398 = vmul.u32 %v2391, %v2382
        %v2399 = vadd.s32 %v2394, %v2396
        %vm2400 = vc.u32 %v2394, %v2396
        %v2401 = vadd.s32 %v2397, 1
        %v2402 = vsel %vm2400, %v2401, %v2397
        %v2403 = vadd.s32 %v2398, %v2402
        %v2404 = vadd.s32 %v2403, 536870912
        %v2405 = vshrl.u32 %v2404, 30
        %v2406 = vshll.u32 %v2405, 30
        %v2407 = vsub.s32 %v2403, %v2406
        %vm2408 = vcmp.lt.s32.totalorder %v2407, 0
        %v2409 = vsub.s32 0, %v2407
        %v2410 = vsel %vm2408, %v2409, %v2407
        %v2411 = vclz %v2410
        %v2412 = vsub.s32 %v2411, 2
        %vm2413 = vcmp.gt.s32.totalorder 0, %v2412
        %v2414 = vsel %vm2413, 0, %v2412
        %v2415 = vsub.s32 32, %v2414
        %v2416 = vshll.u32 %v2407, %v2414
        %v2417 = vshrl.u32 %v2399, %v2415
        %v2418 = vor.u32 %v2416, %v2417
        %v2419 = vsub.s32 4294967266, %v2414
        %v2420 = vadd.s32 %v2419, 127
        %v2421 = vshll.u32 %v2420, 23
        %v2422 = vor.u32 4788187, %v2421
        %v2423 = vand.u32 2147483647, %v2422
        %v2425 = vcvt.s32.f32 %v2418
        %v2426 = vmul.f32 %v2425, %v2423
        %v2427 = vxor.u32 %v2426, 2147483648
        %v2428 = vsel %vm2345, %v2427, %v2426
        %v2429 = vsub.s32 4, %v2405
        %v2430 = vsel %vm2345, %v2429, %v2405
        %v2431 = vsel %vm2344, %v2231, %v2428
        %v2432 = vsel %vm2344, 0, %v2430
        %v2433 = vcosq.f32.pop %v2431
        %v2434 = vsinq.f32.pop %v2431
        %vm2435 = vweird.f32 %v2231
        %v2436 = vadd.s32 %v2432, 3
        %v2437 = vand.u32 %v2436, 3
        %vm2438 = vcmp.lt.s32.totalorder %v2437, 2
        %vm2439 = vcmp.eq.s32.totalorder %v2437, 0
        %v2440 = vxor.u32 %v2434, 2147483648
        %v2441 = vsel %vm2439, %v2433, %v2440
        %vm2442 = vcmp.eq.s32.totalorder %v2437, 2
        %v2443 = vxor.u32 %v2433, 2147483648
        %v2444 = vsel %vm2442, %v2443, %v2434
        %v2445 = vsel %vm2438, %v2441, %v2444
        %v2446 = vsel %vm2435, nan, %v2445
        %v2447 = vand.u32 2147483647, %v2236
        %vm2448 = vcmp.le.f32.partialorder %v2447, 0.7853982
        %vm2449 = vcmp.lt.s32.totalorder %v2236, 0
        %v2450 = vand.u32 %v2236, 2139095040
        %v2451 = vshrl.u32 %v2450, 23
        %v2452 = vsub.s32 %v2451, 127
        %v2453 = vand.u32 2147483647, %v2236
        %v2454 = vand.u32 %v2453, 8388607
        %v2455 = vor.u32 %v2454, 8388608
        %v2456 = vsub.s32 0, %v2455
        %v2457 = vadd.s32 %v2452, 1
        %vm2458 = vcmp.gt.s32.totalorder %v2457, 0
        %v2459 = vsel %vm2458, %v2457, 0
        %v2460 = vshrl.u32 %v2459, 5
        %v2461 = vand.u32 %v2459, 31
        %v2462 = vsub.s32 32, %v2461
        %v2463 = vshrl.u32 683565275, %v2462
        %v2464 = vshll.u32 683565275, %v2461
        %v2465 = vshrl.u32 2475754826, %v2462
        %v2466 = vor.u32 %v2464, %v2465
        %v2467 = vshll.u32 2475754826, %v2461
        %v2468 = vshrl.u32 2131351028, %v2462
        %v2469 = vor.u32 %v2467, %v2468
        %v2470 = vshll.u32 2131351028, %v2461
        %v2471 = vshrl.u32 2102212464, %v2462
        %v2472 = vor.u32 %v2470, %v2471
        %v2473 = vshll.u32 2102212464, %v2461
        %v2474 = vshrl.u32 920167782, %v2462
        %v2475 = vor.u32 %v2473, %v2474
        %v2476 = vshll.u32 920167782, %v2461
        %v2477 = vshrl.u32 1326507024, %v2462
        %v2478 = vor.u32 %v2476, %v2477
        %vm2479 = vcmp.lt.s32.totalorder %v2460, 1
        %vm2480 = vcmp.lt.s32.totalorder %v2460, 2
        %vm2481 = vcmp.lt.s32.totalorder %v2460, 3
        %vm2482 = vcmp.lt.s32.totalorder %v2460, 4
        %v2483 = vsel %vm2479, %v2463, %v2466
        %v2484 = vsel %vm2482, %v2472, 2102212464
        %v2485 = vsel %vm2481, %v2469, %v2484
        %v2486 = vsel %vm2480, %v2483, %v2485
        %v2487 = vsel %vm2479, %v2466, %v2469
        %v2488 = vsel %vm2482, %v2475, 920167782
        %v2489 = vsel %vm2481, %v2472, %v2488
        %v2490 = vsel %vm2480, %v2487, %v2489
        %v2491 = vsel %vm2479, %v2469, %v2472
        %v2492 = vsel %vm2482, %v2478, 1326507024
        %v2493 = vsel %vm2481, %v2475, %v2492
        %v2494 = vsel %vm2480, %v2491, %v2493
        %v2495 = vshll.u32 %v2455, 8
        %v2496 = vmul.u32.u64.compose %v2495, %v2494
        %v2497 = vextract.low.u32 %v2496
        %v2498 = vextract.high.u32 %v2496
        %v2499 = vmul.u32.u64.compose %v2495, %v2490
        %v2500 = vextract.low.u32 %v2499
        %v2501 = vextract.high.u32 %v2499
        %v2502 = vmul.u32 %v2495, %v2486
        %v2503 = vadd.s32 %v2498, %v2500
        %vm2504 = vc.u32 %v2498, %v2500
        %v2505 = vadd.s32 %v2501, 1
        %v2506 = vsel %vm2504, %v2505, %v2501
        %v2507 = vadd.s32 %v2502, %v2506
        %v2508 = vadd.s32 %v2507, 536870912
        %v2509 = vshrl.u32 %v2508, 30
        %v2510 = vshll.u32 %v2509, 30
        %v2511 = vsub.s32 %v2507, %v2510
        %vm2512 = vcmp.lt.s32.totalorder %v2511, 0
        %v2513 = vsub.s32 0, %v2511
        %v2514 = vsel %vm2512, %v2513, %v2511
        %v2515 = vclz %v2514
        %v2516 = vsub.s32 %v2515, 2
        %vm2517 = vcmp.gt.s32.totalorder 0, %v2516
        %v2518 = vsel %vm2517, 0, %v2516
        %v2519 = vsub.s32 32, %v2518
        %v2520 = vshll.u32 %v2511, %v2518
        %v2521 = vshrl.u32 %v2503, %v2519
        %v2522 = vor.u32 %v2520, %v2521
        %v2523 = vsub.s32 4294967266, %v2518
        %v2524 = vadd.s32 %v2523, 127
        %v2525 = vshll.u32 %v2524, 23
        %v2526 = vor.u32 4788187, %v2525
        %v2527 = vand.u32 2147483647, %v2526
        %v2529 = vcvt.s32.f32 %v2522
        %v2530 = vmul.f32 %v2529, %v2527
        %v2531 = vxor.u32 %v2530, 2147483648
        %v2532 = vsel %vm2449, %v2531, %v2530
        %v2533 = vsub.s32 4, %v2509
        %v2534 = vsel %vm2449, %v2533, %v2509
        %v2535 = vsel %vm2448, %v2236, %v2532
        %v2536 = vsel %vm2448, 0, %v2534
        %v2537 = vcosq.f32.pop %v2535
        %v2538 = vsinq.f32.pop %v2535
        %vm2539 = vweird.f32 %v2236
        %v2540 = vadd.s32 %v2536, 3
        %v2541 = vand.u32 %v2540, 3
        %vm2542 = vcmp.lt.s32.totalorder %v2541, 2
        %vm2543 = vcmp.eq.s32.totalorder %v2541, 0
        %v2544 = vxor.u32 %v2538, 2147483648
        %v2545 = vsel %vm2543, %v2537, %v2544
        %vm2546 = vcmp.eq.s32.totalorder %v2541, 2
        %v2547 = vxor.u32 %v2537, 2147483648
        %v2548 = vsel %vm2546, %v2547, %v2538
        %v2549 = vsel %vm2542, %v2545, %v2548
        %v2550 = vsel %vm2539, nan, %v2549
        %v2551 = vmul.f32 %v2342, %v1683
        %v2552 = vmul.f32 %v2446, %v1685
        %v2553 = vmul.f32 %v2550, %v1684
        %v2554 = vadd.f32 %v1222, %v2551
        %v2555 = vadd.f32 %v1227, %v2552
        %v2556 = vadd.f32 %v1232, %v2553
        %v2557 = vld [vmem:[%s11] sm:$0x1]
        %v2558 = vld [vmem:[#allocation2] sm:$0x1]
        %2560 = vset.pattern.permute.xlu0 0
        %2561 = vperm.xlu0 %2560, %v2558
        %v2562 = vpop.permute.xlu0 %2561
        %v2564 = vlaneseq
        %v2565 = vshrl.u32 %v2564, 7
        %v2566 = vsub.s32 0, %v2565
        %v2567 = vrot.slane %v2562, %v2566
        %v2569 = vsel %vm1135, %v2557, 0
        %v2572 = vsel %vm1151, %v2556, 0
        %2574 = vmatprep.subr.mxu0 0.0
        %2575 = vmatpush1.msra.mxu0 %v2554
        %2576 = vmatprep.subr.mxu0 0.0
        %2577 = vmatpush1.msra.mxu0 %v2555
        %2578 = vmatprep.subr.mxu0 0.0
        %2579 = vmatpush1.msra.mxu0 %v2572
        %2580 = vmatprep.subr.mxu0 0.0
        %2581 = vmatpush1.msra.mxu0 0.0
        %2582 = vmatprep.subr.mxu0 0.0
        %2583 = vmatpush1.msra.mxu0 0.0
        %2584 = vmatprep.subr.mxu0 0.0
        %2585 = vmatpush1.msra.mxu0 0.0
        %2586 = vmatprep.subr.mxu0 0.0
        %2587 = vmatpush1.msra.mxu0 0.0
        %2588 = vmatprep.subr.mxu0 0.0
        %2589 = vmatpush1.msra.mxu0 0.0
        %2590 = vmatprep.subr.mxu0 0.0
        %2591 = vmatpush1.msra.mxu0 0.0
        %2592 = vmatprep.subr.mxu0 0.0
        %2593 = vmatpush1.msra.mxu0 0.0
        %2594 = vmatprep.subr.mxu0 0.0
        %2595 = vmatpush1.msra.mxu0 0.0
        %2596 = vmatprep.subr.mxu0 0.0
        %2597 = vmatpush1.msra.mxu0 0.0
        %2598 = vmatprep.subr.mxu0 0.0
        %2599 = vmatpush1.msra.mxu0 0.0
        %2600 = vmatprep.subr.mxu0 0.0
        %2601 = vmatpush1.msra.mxu0 0.0
        %2602 = vmatprep.subr.mxu0 0.0
        %2603 = vmatpush1.msra.mxu0 0.0
        %2604 = vmatprep.subr.mxu0 0.0
        %2605 = vmatpush1.msra.mxu0 0.0
        %2606 = vmatprep.subr.mxu0 0.0
        %2607 = vmatpush1.msra.mxu0 0.0
        %2608 = vmatprep.subr.mxu0 0.0
        %2609 = vmatpush1.msra.mxu0 0.0
        %2610 = vmatprep.subr.mxu0 0.0
        %2611 = vmatpush1.msra.mxu0 0.0
        %2612 = vmatprep.subr.mxu0 0.0
        %2613 = vmatpush1.msra.mxu0 0.0
        %2614 = vmatprep.subr.mxu0 0.0
        %2615 = vmatpush1.msra.mxu0 0.0
        %2616 = vmatprep.subr.mxu0 0.0
        %2617 = vmatpush1.msra.mxu0 0.0
        %2618 = vmatprep.subr.mxu0 0.0
        %2619 = vmatpush1.msra.mxu0 0.0
        %2620 = vmatprep.subr.mxu0 0.0
        %2621 = vmatpush1.msra.mxu0 0.0
        %2622 = vmatprep.subr.mxu0 0.0
        %2623 = vmatpush1.msra.mxu0 0.0
        %2624 = vmatprep.subr.mxu0 0.0
        %2625 = vmatpush1.msra.mxu0 0.0
        %2626 = vmatprep.subr.mxu0 0.0
        %2627 = vmatpush1.msra.mxu0 0.0
        %2628 = vmatprep.subr.mxu0 0.0
        %2629 = vmatpush1.msra.mxu0 0.0
        %2630 = vmatprep.subr.mxu0 0.0
        %2631 = vmatpush1.msra.mxu0 0.0
        %2632 = vmatprep.subr.mxu0 0.0
        %2633 = vmatpush1.msra.mxu0 0.0
        %2634 = vmatprep.subr.mxu0 0.0
        %2635 = vmatpush1.msra.mxu0 0.0
        %2636 = vmatprep.subr.mxu0 0.0
        %2637 = vmatpush1.msra.mxu0 0.0
        %2638 = vmatprep.mubr.f32.mxu0 0.0
        %2639 = vmatmul.mubr.f32.gmra.mrb[0].mxu0 %v2569
        %v2640 = vpop.f32.mrb[0].mxu0
        %v2641 = vadd.f32 %v2567, %v2640
        %v2642 = vpop.f32.mrb[0].mxu0
        %2643 = vdwg.mxu0
        %2644 = vst [vmem:[%s432] sm:$0x1] %v2641
        %s2645 = sand.u32 %s315, 1
        %s2646 = scalar_lea.sflag [#allocation4], %s2645
        %s2647 = sand.u32 %s315, 1
        %s2648 = scalar_lea.vmem [#allocation3], %s2647
        // Predicated region
        $region73: #{ffn_forward.1} parent=71 // pred_check
          %p2649 = pneg %p325
        $region74: #{ffn_forward.1} parent=71 // pred_check_branch
          %2651 = sbr.rel (%p2649) target = $region76
        $region75: #{ffn_forward.1} parent=71 // pred_region
          %s2653 = ssub.s32 16, 16
          %2654 = vsyncadd %s2646, %s2653
          %s2655 = smul.addr %s29, 16
          %s2656 = scalar_lea.hbm %s13, %s2655
          %s2658 = sshll.u32 %s2648, 4
          %s2659 = int_to_ptr.vmem [resolvable:$true] %s2658
          %2661 = dma.vmem_to_hbm [thread:$0]  %s2659, 16, %s2656, %s2646
        $region76: #{ffn_forward.1} parent=71 // pred_fallthru
          _
      $region72: #{ffn_forward.1} parent=5 // pred_fallthru
        _
      %p2662 = scmp.le.s32.totalorder 2, %s24
      // Predicated region
      $region77: #{ffn_forward.1} parent=5 // pred_check
        %p2663 = pneg %p2662
      $region78: #{ffn_forward.1} parent=5 // pred_check_branch
        %2665 = sbr.rel (%p2663) target = $region80
      $region79: #{ffn_forward.1} parent=5 // pred_region
        %s2666 = ssub.s32 %s24, 2
        // Predicated region
        $region81: #{ffn_forward.1} parent=79 // pred_check
          %p2667 = pneg %p331
        $region82: #{ffn_forward.1} parent=79 // pred_check_branch
          %2669 = sbr.rel (%p2667) target = $region84
        $region83: #{ffn_forward.1} parent=79 // pred_region
          %s2670 = sand.u32 %s316, 1
          %s2671 = scalar_lea.sflag [#allocation4], %s2670
          %s2672 = sand.u32 %s316, 1
          %s2673 = scalar_lea.vmem [#allocation3], %s2672
          %2674 = dma.done %s2671, 16
        $region84: #{ffn_forward.1} parent=79 // pred_fallthru
          _
      $region80: #{ffn_forward.1} parent=5 // pred_fallthru
        _
    $region6: #{ffn_forward.1} parent=1 // loop_footer
      %s28 = sadd.s32 1, %s24
    $region7: #{ffn_forward.1} parent=1 // loop_footer_branch
      %23 = sbr.rel target = $region3
    $region8: #{ffn_forward.1} parent=1 // loop_exit
      _
    %2675 = vsyncpa [#allocation4], 1
    %s2676 = scalar_lea.sflag [#allocation4], 1
    %2677 = vsyncpa %s2676, 1

</llo_original>
